<compile_context>
chip_gen: v6e
topology: v6e:2x2x1
jax: 0.10.0
libtpu: 0.0.40
codegen_flags: <defaults>
</compile_context>

<pallas_src>
import functools

import jax
import jax.numpy as jnp
from jax.experimental import pallas as pl
from jax.experimental.pallas import tpu as pltpu


def lstm_chunk_kernel(gx_ref, len_ref, whh_hbm, out_ref, hn_ref, cn_ref,
                      h_sc, c_sc, whh_sc, whh_sem, *, hidden_pad, chunk):
    """One grid step == `chunk` LSTM timesteps for one batch block.

    gx_ref:  (chunk, Bb, 4*Hp) bf16  precomputed x-projection + bias for these timesteps
    len_ref: (Bb, 1)           int32 sequence lengths
    whh_hbm: (Hp, 4*Hp)        bf16  hidden->gates weights in HBM (DMA'd once)
    out_ref: (Bb, chunk, Hp)   bf16  batch-first per-step outputs (zeroed past length)
    hn_ref/cn_ref: (1, Bb, Hp) f32   final hidden/cell state (written on last chunk)
    h_sc/c_sc: (Bb, Hp)        f32   VMEM carries across grid steps
    whh_sc:  (Hp, 4*Hp)        bf16  single-buffered resident copy of W_hh^T
    """
    cid = pl.program_id(1)
    Hp = hidden_pad

    @pl.when(cid == 0)
    def _():
        # Single-buffered resident weight: one DMA per batch block / per core.
        cp = pltpu.make_async_copy(whh_hbm, whh_sc, whh_sem)
        cp.start()
        cp.wait()
        h_sc[...] = jnp.zeros_like(h_sc)
        c_sc[...] = jnp.zeros_like(c_sc)

    lens = len_ref[...]                          # (Bb, 1) int32
    whh = whh_sc[...]                            # (Hp, 4*Hp) bf16
    t0 = cid * chunk

    # Hoisted pack_padded_sequence mask: ONE compare per chunk instead of one per step.
    step_ids = t0 + jax.lax.broadcasted_iota(
        jnp.int32, (chunk,) + lens.shape, 0)     # (chunk, Bb, 1)
    mask_all = lens[None, :, :] > step_ids       # (chunk, Bb, 1) bool

    h = h_sc[...]                                # (Bb, Hp) f32
    c = c_sc[...]                                # (Bb, Hp) f32

    outs = []
    # Serial recurrence: only the small h @ W_hh^T matmul is on the critical path.
    for k in range(chunk):
        gates = gx_ref[k].astype(jnp.float32) + jnp.dot(
            h.astype(jnp.bfloat16), whh, preferred_element_type=jnp.float32)

        # PyTorch gate order i, f, g, o; each slice is a 128-lane-aligned block.
        i_g = jax.nn.sigmoid(gates[:, 0 * Hp:1 * Hp])
        f_g = jax.nn.sigmoid(gates[:, 1 * Hp:2 * Hp])
        g_g = jnp.tanh(gates[:, 2 * Hp:3 * Hp])
        o_g = jax.nn.sigmoid(gates[:, 3 * Hp:4 * Hp])

        c_new = f_g * c + i_g * g_g
        h_new = o_g * jnp.tanh(c_new)

        # Steps with t >= length[b] do not update the state and the padded output is zero.
        mask = mask_all[k]                       # (Bb, 1) bool
        outs.append(jnp.where(mask, h_new, 0.0))
        h = jnp.where(mask, h_new, h)
        c = jnp.where(mask, c_new, c)

    h_sc[...] = h
    c_sc[...] = c

    # Coalesced, lane-dense, batch-first bf16 store of the whole chunk at once.
    out_ref[...] = jnp.stack(outs, axis=1).astype(out_ref.dtype)

    @pl.when(cid == pl.num_programs(1) - 1)
    def _():
        hn_ref[0] = h.astype(hn_ref.dtype)
        cn_ref[0] = c.astype(cn_ref.dtype)


def lstm_recurrence_pallas(gates_x, lengths, whh_pad, *, hidden_pad, chunk):
    """gates_x: (T, B, 4*Hp) bf16 time-major precomputed x-projection (+bias), B % 8 == 0.
    Returns (out (B, T_pad, Hp) bf16 batch-first, h_n (1,B,Hp) f32, c_n (1,B,Hp) f32)."""
    T, B, G = gates_x.shape
    Hp = hidden_pad
    assert G == 4 * Hp and B % 8 == 0

    # Prefer a chunk that divides T so gates_x never needs a full-tensor pad copy.
    chunk = max(1, min(chunk, T))
    if T % chunk != 0:
        d = chunk
        while d > 1 and T % d != 0:
            d -= 1
        if d * 2 >= chunk:
            chunk = d
    n_chunks = pl.cdiv(T, chunk)
    T_pad = n_chunks * chunk
    if T_pad != T:
        # Only reached when no reasonable divisor exists; padded steps are masked out.
        gates_x = jnp.pad(gates_x, ((0, T_pad - T), (0, 0), (0, 0)))

    # v7x: split the batch across the two TensorCores once it is >= 2 sublane tiles.
    n_bsplit = 2 if (B >= 16 and B % 16 == 0) else 1
    Bb = B // n_bsplit

    len2d = jnp.asarray(lengths, jnp.int32).reshape(B, 1)

    kernel = functools.partial(lstm_chunk_kernel, hidden_pad=Hp, chunk=chunk)

    grid_spec = pltpu.PrefetchScalarGridSpec(
        num_scalar_prefetch=0,
        grid=(n_bsplit, n_chunks),
        in_specs=[
            pl.BlockSpec((chunk, Bb, 4 * Hp), lambda p, c: (c, p, 0)),   # gates_x chunk
            pl.BlockSpec((Bb, 1), lambda p, c: (p, 0)),                  # lengths
            pl.BlockSpec(memory_space=pl.ANY),                           # W_hh^T (HBM)
        ],
        out_specs=[
            pl.BlockSpec((Bb, chunk, Hp), lambda p, c: (p, c, 0)),       # batch-first out
            pl.BlockSpec((1, Bb, Hp), lambda p, c: (0, p, 0)),           # h_n
            pl.BlockSpec((1, Bb, Hp), lambda p, c: (0, p, 0)),           # c_n
        ],
        scratch_shapes=[
            pltpu.VMEM((Bb, Hp), jnp.float32),                           # h carry
            pltpu.VMEM((Bb, Hp), jnp.float32),                           # c carry
            pltpu.VMEM((Hp, 4 * Hp), jnp.bfloat16),                      # resident W_hh^T
            pltpu.SemaphoreType.DMA(()),                                 # its DMA sem
        ],
    )

    out_shapes = (
        jax.ShapeDtypeStruct((B, T_pad, Hp), jnp.bfloat16),
        jax.ShapeDtypeStruct((1, B, Hp), jnp.float32),
        jax.ShapeDtypeStruct((1, B, Hp), jnp.float32),
    )

    # VMEM budget derived from actual buffer sizes (double-buffered streamed operands,
    # single-buffered resident weight) with margin, instead of a hard-coded constant.
    resident_bytes = (
        2 * chunk * Bb * 4 * Hp * 2        # gates_x chunk, 2 pipeline buffers, bf16
        + 2 * Bb * chunk * Hp * 2          # output chunk, 2 pipeline buffers, bf16
        + 2 * Bb * 128 * 4                 # lengths (lane-padded), 2 buffers
        + 2 * 2 * Bb * Hp * 4              # h_n / c_n blocks
        + Hp * 4 * Hp * 2                  # W_hh^T single VMEM copy
        + 2 * Bb * Hp * 4                  # h/c carries
    )
    vmem_limit = int(min(max(2 * resident_bytes + (4 << 20), 16 << 20), 100 << 20))

    return pl.pallas_call(
        kernel,
        out_shape=out_shapes,
        grid_spec=grid_spec,
        compiler_params=pltpu.CompilerParams(
            dimension_semantics=("parallel", "arbitrary"),   # batch split || serial time
            vmem_limit_bytes=vmem_limit,
        ),
    )(gates_x, len2d, whh_pad)


@functools.partial(jax.jit, static_argnames=("hidden_size", "hidden_pad", "chunk"))
def encoder_forward(token_ids, lengths, embedding, wih_pad, bias_pad, whh_pad,
                    *, hidden_size, hidden_pad, chunk):
    B, T = token_ids.shape
    E = embedding.shape[1]
    Hp = hidden_pad

    # Pad the batch to the sublane tile so the recurrence uses full (8,128) vregs and the
    # MXU M dimension; padded rows have length 0 so they never touch the state.
    B_pad = ((max(B, 8) + 7) // 8) * 8
    lengths = jnp.asarray(lengths, jnp.int32)
    if B_pad != B:
        token_ids = jnp.pad(token_ids, ((0, B_pad - B), (0, 0)))   # pad_idx rows
        lengths = jnp.pad(lengths, (0, B_pad - B))

    # Embedding gather directly in time-major bf16; dropout = identity (eval mode).
    x_tbe = jnp.take(embedding, token_ids.T, axis=0)               # (T, B_pad, E) bf16

    # Hoisted input projection: one big (T*B_pad, E) x (E, 4*Hp) MXU matmul, bias fused.
    gx = jnp.dot(x_tbe.reshape(T * B_pad, E), wih_pad,
                 preferred_element_type=jnp.float32) + bias_pad
    gx = gx.astype(jnp.bfloat16).reshape(T, B_pad, 4 * Hp)

    out_bth, h_n, c_n = lstm_recurrence_pallas(
        gx, lengths, whh_pad, hidden_pad=Hp, chunk=chunk)

    # Already batch-first: just strip batch/hidden/time padding.
    outputs = out_bth[:B, :T, :hidden_size]
    return outputs, h_n[:, :B, :hidden_size], c_n[:, :B, :hidden_size]


def _pad_gate_weights(w, hidden, hidden_pad, in_dim, in_pad):
    """w: (4*H, in_dim) PyTorch layout (gates i,f,g,o stacked along rows).
    Returns (in_pad, 4*hidden_pad) transposed weights with each gate block placed at a
    128-lane-aligned offset and zero padding elsewhere."""
    w4 = jnp.asarray(w, jnp.float32).reshape(4, hidden, in_dim)
    out = jnp.zeros((4, hidden_pad, in_pad), jnp.float32)
    out = out.at[:, :hidden, :in_dim].set(w4)
    return out.reshape(4 * hidden_pad, in_pad).T


class EncoderPallas:
    """JAX/Pallas equivalent of the PyTorch Encoder (rnn_type='LSTM', 1 layer, eval mode)."""

    def __init__(self, input_vocab_size, embedding_size, hidden_size,
                 encoder_layers=1, rnn_type="LSTM", dropout=0.2, pad_idx=0, seed=0,
                 chunk=8):
        assert rnn_type == "LSTM" and encoder_layers == 1
        self.embedding_size = embedding_size
        self.hidden_size = hidden_size
        self.pad_idx = pad_idx
        self.dropout = dropout
        self.chunk = chunk

        key = jax.random.PRNGKey(seed)
        k_emb, k_wih, k_whh, k_bih, k_bhh = jax.random.split(key, 5)

        # Deterministic parameter init (shapes match nn.Embedding / nn.LSTM).
        emb = 0.1 * jax.random.normal(k_emb, (input_vocab_size, embedding_size), jnp.float32)
        emb = emb.at[pad_idx].set(0.0)          # padding_idx row is zero, as in PyTorch
        self.embedding = emb.astype(jnp.bfloat16)   # bf16 gather / matmul LHS

        k = 1.0 / jnp.sqrt(hidden_size)
        self.w_ih = jax.random.uniform(k_wih, (4 * hidden_size, embedding_size),
                                       jnp.float32, -k, k)
        self.w_hh = jax.random.uniform(k_whh, (4 * hidden_size, hidden_size),
                                       jnp.float32, -k, k)
        self.b_ih = jax.random.uniform(k_bih, (4 * hidden_size,), jnp.float32, -k, k)
        self.b_hh = jax.random.uniform(k_bhh, (4 * hidden_size,), jnp.float32, -k, k)

        # Kernel-side layout: hidden padded to a 128-lane multiple, weights transposed +
        # gate-padded, cast to bf16 (matmul inputs only), bias fused & padded (f32).
        # NOTE: on v6e/v7x a 256-multiple Hp fills the 2x256^2 MXU depth for large H;
        # 128 is optimal on v5e and for this small toy size.
        H = hidden_size
        Hp = ((H + 127) // 128) * 128
        self.hidden_pad = Hp
        self.wih_pad = _pad_gate_weights(self.w_ih, H, Hp,
                                         embedding_size, embedding_size).astype(jnp.bfloat16)
        self.whh_pad = _pad_gate_weights(self.w_hh, H, Hp, H, Hp).astype(jnp.bfloat16)
        b4 = (self.b_ih + self.b_hh).reshape(4, H)
        self.bias_pad = (jnp.zeros((4, Hp), jnp.float32).at[:, :H].set(b4)
                         .reshape(1, 4 * Hp))

    def __call__(self, input_idxs, input_lengths, max_len=None):
        # input_idxs: (B, T) int32 token ids; input_lengths: (B,) int32 valid lengths.
        outputs, h_n, c_n = encoder_forward(
            input_idxs, input_lengths, self.embedding,
            self.wih_pad, self.bias_pad, self.whh_pad,
            hidden_size=self.hidden_size, hidden_pad=self.hidden_pad, chunk=self.chunk)

        if max_len is None:
            # pad_packed_sequence(batch_first=True): T_out = max(lengths).  This is the
            # only host sync; pass max_len explicitly to keep the whole call jittable.
            max_len = int(jax.device_get(jnp.max(input_lengths)))
        outputs = outputs[:, :max_len, :]
        return outputs, (h_n, c_n)


if __name__ == "__main__":
    vocab_size = 20
    embedding_size = 16
    hidden_size = 32
    B, T = 2, 8

    enc = EncoderPallas(vocab_size, embedding_size, hidden_size,
                        encoder_layers=1, rnn_type="LSTM", dropout=0.2, pad_idx=0, seed=0)

    key = jax.random.PRNGKey(0)
    k_idx, _ = jax.random.split(key)
    input_lengths = jnp.array([8, 5], dtype=jnp.int32)
    input_idxs = jax.random.randint(k_idx, (B, T), 1, vocab_size, dtype=jnp.int32)
    # Zero-out (pad) positions past each sequence's length, as a real padded batch would.
    pos = jnp.arange(T)[None, :]
    input_idxs = jnp.where(pos < input_lengths[:, None], input_idxs, 0)

    outputs, (h_n, c_n) = enc(input_idxs, input_lengths)
    jax.block_until_ready((outputs, h_n, c_n))

    assert outputs.shape == (B, int(jnp.max(input_lengths)), hidden_size)
    assert h_n.shape == (1, B, hidden_size) and c_n.shape == (1, B, hidden_size)
    assert bool(jnp.all(jnp.isfinite(outputs.astype(jnp.float32))))
    assert bool(jnp.all(jnp.isfinite(h_n))) and bool(jnp.all(jnp.isfinite(c_n)))
    print("KERNEL_OK")
</pallas_src>

<mosaic_0001>
module attributes {stable_mosaic.version = 11 : i64} {
  func.func @lstm_chunk_kernel(%arg0: i32, %arg1: i32, %arg2: memref<8x8x512xbf16, #tpu.memory_space<vmem>>, %arg3: memref<8x1xi32, #tpu.memory_space<vmem>>, %arg4: memref<128x512xbf16, #tpu.memory_space<any>>, %arg5: memref<8x8x128xbf16, #tpu.memory_space<vmem>>, %arg6: memref<1x8x128xf32, #tpu.memory_space<vmem>>, %arg7: memref<1x8x128xf32, #tpu.memory_space<vmem>>, %arg8: memref<8x128xf32, #tpu.memory_space<vmem>>, %arg9: memref<8x128xf32, #tpu.memory_space<vmem>>, %arg10: memref<128x512xbf16, #tpu.memory_space<vmem>>, %arg11: memref<!tpu.dma_semaphore, #tpu.memory_space<semaphore_mem>>) attributes {dimension_semantics = [#tpu.dimension_semantics<parallel>, #tpu.dimension_semantics<arbitrary>], iteration_bounds = array<i64: 1, 1>, scalar_prefetch = 0 : i64, scratch_operands = 4 : i64, tpu.core_type = #tpu.core_type<tc>, window_params = [{transform_indices = @transform_0, window_bounds = array<i64: 8, 8, 512>}, {transform_indices = @transform_1, window_bounds = array<i64: 8, 1>}, {}, {transform_indices = @transform_3, window_bounds = array<i64: 8, 8, 128>}, {transform_indices = @transform_4, window_bounds = array<i64: 1, 8, 128>}, {transform_indices = @transform_5, window_bounds = array<i64: 1, 8, 128>}]} {
    %c0_i32 = arith.constant 0 : i32
    %0 = arith.cmpi eq, %arg1, %c0_i32 : i32
    %1 = arith.extui %0 : i1 to i32
    %c0_i32_0 = arith.constant 0 : i32
    %2 = arith.cmpi ne, %1, %c0_i32_0 : i32
    scf.if %2 {
      tpu.enqueue_dma source(%arg4 : memref<128x512xbf16, #tpu.memory_space<any>>) target(%arg10 : memref<128x512xbf16, #tpu.memory_space<vmem>>) target_semaphore(%arg11 : memref<!tpu.dma_semaphore, #tpu.memory_space<semaphore_mem>>)
      tpu.wait_dma2 semaphore(%arg11 : memref<!tpu.dma_semaphore, #tpu.memory_space<semaphore_mem>>) src(%arg4 : memref<128x512xbf16, #tpu.memory_space<any>>) dst(%arg10 : memref<128x512xbf16, #tpu.memory_space<vmem>>)
      %cst_73 = arith.constant 0.000000e+00 : f32
      %374 = vector.broadcast %cst_73 : f32 to vector<8x128xf32>
      %c0_74 = arith.constant 0 : index
      %c0_75 = arith.constant 0 : index
      %375 = vector.load %arg8[%c0_74, %c0_75] : memref<8x128xf32, #tpu.memory_space<vmem>>, vector<8x128xf32>
      tpu.vector_store %arg8[%c0_74, %c0_75], %374 {strides = array<i32>} : memref<8x128xf32, #tpu.memory_space<vmem>>, vector<8x128xf32>,
      %cst_76 = arith.constant 0.000000e+00 : f32
      %376 = vector.broadcast %cst_76 : f32 to vector<8x128xf32>
      %c0_77 = arith.constant 0 : index
      %c0_78 = arith.constant 0 : index
      %377 = vector.load %arg9[%c0_77, %c0_78] : memref<8x128xf32, #tpu.memory_space<vmem>>, vector<8x128xf32>
      tpu.vector_store %arg9[%c0_77, %c0_78], %376 {strides = array<i32>} : memref<8x128xf32, #tpu.memory_space<vmem>>, vector<8x128xf32>,
    } else {
    }
    %c0 = arith.constant 0 : index
    %c0_1 = arith.constant 0 : index
    %3 = vector.load %arg3[%c0, %c0_1] : memref<8x1xi32, #tpu.memory_space<vmem>>, vector<8x1xi32>
    %c0_2 = arith.constant 0 : index
    %c0_3 = arith.constant 0 : index
    %4 = vector.load %arg10[%c0_2, %c0_3] : memref<128x512xbf16, #tpu.memory_space<vmem>>, vector<128x512xbf16>
    %c8_i32 = arith.constant 8 : i32
    %5 = arith.muli %arg1, %c8_i32 : i32
    %6 = tpu.iota {dimensions = array<i32: 0>} : vector<8x8x1xi32>
    %7 = vector.broadcast %5 : i32 to vector<8x8x1xi32>
    %8 = arith.addi %7, %6 : vector<8x8x1xi32>
    %9 = vector.shape_cast %3 : vector<8x1xi32> to vector<1x8x1xi32>
    %10 = vector.broadcast %9 : vector<1x8x1xi32> to vector<8x8x1xi32>
    %11 = arith.cmpi sgt, %10, %8 : vector<8x8x1xi32>
    %c0_4 = arith.constant 0 : index
    %c0_5 = arith.constant 0 : index
    %12 = vector.load %arg8[%c0_4, %c0_5] : memref<8x128xf32, #tpu.memory_space<vmem>>, vector<8x128xf32>
    %c0_6 = arith.constant 0 : index
    %c0_7 = arith.constant 0 : index
    %13 = vector.load %arg9[%c0_6, %c0_7] : memref<8x128xf32, #tpu.memory_space<vmem>>, vector<8x128xf32>
    %c0_8 = arith.constant 0 : index
    %c0_9 = arith.constant 0 : index
    %c0_10 = arith.constant 0 : index
    %14 = vector.load %arg2[%c0_8, %c0_9, %c0_10] : memref<8x8x512xbf16, #tpu.memory_space<vmem>>, vector<1x8x512xbf16>
    %15 = vector.shape_cast %14 : vector<1x8x512xbf16> to vector<8x512xbf16>
    %16 = arith.extf %15 : vector<8x512xbf16> to vector<8x512xf32>
    %17 = arith.truncf %12 : vector<8x128xf32> to vector<8x128xbf16>
    %cst = arith.constant dense<0.000000e+00> : vector<8x512xf32>
    %18 = tpu.matmul %17, %4, %cst {dimension_numbers = #tpu.dot_dimension_numbers<[1], [0], [0], [1], [0, 0, 1, 1], [], []>} : vector<8x128xbf16>, vector<128x512xbf16>, vector<8x512xf32> -> vector<8x512xf32>
    %19 = arith.addf %16, %18 : vector<8x512xf32>
    %20 = vector.extract_strided_slice %19 {offsets = [0, 0], sizes = [8, 128], strides = [1, 1]} : vector<8x512xf32> to vector<8x128xf32>
    %21 = arith.negf %20 : vector<8x128xf32>
    %22 = math.exp %21 : vector<8x128xf32>
    %cst_11 = arith.constant 1.000000e+00 : f32
    %23 = vector.broadcast %cst_11 : f32 to vector<8x128xf32>
    %24 = arith.addf %23, %22 : vector<8x128xf32>
    %25 = arith.divf %23, %24 : vector<8x128xf32>
    %26 = vector.extract_strided_slice %19 {offsets = [0, 128], sizes = [8, 128], strides = [1, 1]} : vector<8x512xf32> to vector<8x128xf32>
    %27 = arith.negf %26 : vector<8x128xf32>
    %28 = math.exp %27 : vector<8x128xf32>
    %cst_12 = arith.constant 1.000000e+00 : f32
    %29 = vector.broadcast %cst_12 : f32 to vector<8x128xf32>
    %30 = arith.addf %29, %28 : vector<8x128xf32>
    %31 = arith.divf %29, %30 : vector<8x128xf32>
    %32 = vector.extract_strided_slice %19 {offsets = [0, 256], sizes = [8, 128], strides = [1, 1]} : vector<8x512xf32> to vector<8x128xf32>
    %33 = math.tanh %32 : vector<8x128xf32>
    %34 = vector.extract_strided_slice %19 {offsets = [0, 384], sizes = [8, 128], strides = [1, 1]} : vector<8x512xf32> to vector<8x128xf32>
    %35 = arith.negf %34 : vector<8x128xf32>
    %36 = math.exp %35 : vector<8x128xf32>
    %cst_13 = arith.constant 1.000000e+00 : f32
    %37 = vector.broadcast %cst_13 : f32 to vector<8x128xf32>
    %38 = arith.addf %37, %36 : vector<8x128xf32>
    %39 = arith.divf %37, %38 : vector<8x128xf32>
    %40 = arith.mulf %31, %13 : vector<8x128xf32>
    %41 = arith.mulf %25, %33 : vector<8x128xf32>
    %42 = arith.addf %40, %41 : vector<8x128xf32>
    %43 = math.tanh %42 : vector<8x128xf32>
    %44 = arith.mulf %39, %43 : vector<8x128xf32>
    %45 = vector.extract_strided_slice %11 {offsets = [0, 0, 0], sizes = [1, 8, 1], strides = [1, 1, 1]} : vector<8x8x1xi1> to vector<1x8x1xi1>
    %46 = vector.shape_cast %45 : vector<1x8x1xi1> to vector<8x1xi1>
    %cst_14 = arith.constant 0.000000e+00 : f32
    %47 = vector.shape_cast %46 : vector<8x1xi1> to vector<8x1xi1>
    %48 = vector.broadcast %47 : vector<8x1xi1> to vector<8x128xi1>
    %49 = vector.broadcast %cst_14 : f32 to vector<8x128xf32>
    %50 = arith.select %48, %44, %49 : vector<8x128xi1>, vector<8x128xf32>
    %51 = vector.shape_cast %46 : vector<8x1xi1> to vector<8x1xi1>
    %52 = vector.broadcast %51 : vector<8x1xi1> to vector<8x128xi1>
    %53 = arith.select %52, %44, %12 : vector<8x128xi1>, vector<8x128xf32>
    %54 = vector.shape_cast %46 : vector<8x1xi1> to vector<8x1xi1>
    %55 = vector.broadcast %54 : vector<8x1xi1> to vector<8x128xi1>
    %56 = arith.select %55, %42, %13 : vector<8x128xi1>, vector<8x128xf32>
    %c1 = arith.constant 1 : index
    %c0_15 = arith.constant 0 : index
    %c0_16 = arith.constant 0 : index
    %57 = vector.load %arg2[%c1, %c0_15, %c0_16] : memref<8x8x512xbf16, #tpu.memory_space<vmem>>, vector<1x8x512xbf16>
    %58 = vector.shape_cast %57 : vector<1x8x512xbf16> to vector<8x512xbf16>
    %59 = arith.extf %58 : vector<8x512xbf16> to vector<8x512xf32>
    %60 = arith.truncf %53 : vector<8x128xf32> to vector<8x128xbf16>
    %cst_17 = arith.constant dense<0.000000e+00> : vector<8x512xf32>
    %61 = tpu.matmul %60, %4, %cst_17 {dimension_numbers = #tpu.dot_dimension_numbers<[1], [0], [0], [1], [0, 0, 1, 1], [], []>} : vector<8x128xbf16>, vector<128x512xbf16>, vector<8x512xf32> -> vector<8x512xf32>
    %62 = arith.addf %59, %61 : vector<8x512xf32>
    %63 = vector.extract_strided_slice %62 {offsets = [0, 0], sizes = [8, 128], strides = [1, 1]} : vector<8x512xf32> to vector<8x128xf32>
    %64 = arith.negf %63 : vector<8x128xf32>
    %65 = math.exp %64 : vector<8x128xf32>
    %cst_18 = arith.constant 1.000000e+00 : f32
    %66 = vector.broadcast %cst_18 : f32 to vector<8x128xf32>
    %67 = arith.addf %66, %65 : vector<8x128xf32>
    %68 = arith.divf %66, %67 : vector<8x128xf32>
    %69 = vector.extract_strided_slice %62 {offsets = [0, 128], sizes = [8, 128], strides = [1, 1]} : vector<8x512xf32> to vector<8x128xf32>
    %70 = arith.negf %69 : vector<8x128xf32>
    %71 = math.exp %70 : vector<8x128xf32>
    %cst_19 = arith.constant 1.000000e+00 : f32
    %72 = vector.broadcast %cst_19 : f32 to vector<8x128xf32>
    %73 = arith.addf %72, %71 : vector<8x128xf32>
    %74 = arith.divf %72, %73 : vector<8x128xf32>
    %75 = vector.extract_strided_slice %62 {offsets = [0, 256], sizes = [8, 128], strides = [1, 1]} : vector<8x512xf32> to vector<8x128xf32>
    %76 = math.tanh %75 : vector<8x128xf32>
    %77 = vector.extract_strided_slice %62 {offsets = [0, 384], sizes = [8, 128], strides = [1, 1]} : vector<8x512xf32> to vector<8x128xf32>
    %78 = arith.negf %77 : vector<8x128xf32>
    %79 = math.exp %78 : vector<8x128xf32>
    %cst_20 = arith.constant 1.000000e+00 : f32
    %80 = vector.broadcast %cst_20 : f32 to vector<8x128xf32>
    %81 = arith.addf %80, %79 : vector<8x128xf32>
    %82 = arith.divf %80, %81 : vector<8x128xf32>
    %83 = arith.mulf %74, %56 : vector<8x128xf32>
    %84 = arith.mulf %68, %76 : vector<8x128xf32>
    %85 = arith.addf %83, %84 : vector<8x128xf32>
    %86 = math.tanh %85 : vector<8x128xf32>
    %87 = arith.mulf %82, %86 : vector<8x128xf32>
    %88 = vector.extract_strided_slice %11 {offsets = [1, 0, 0], sizes = [1, 8, 1], strides = [1, 1, 1]} : vector<8x8x1xi1> to vector<1x8x1xi1>
    %89 = vector.shape_cast %88 : vector<1x8x1xi1> to vector<8x1xi1>
    %cst_21 = arith.constant 0.000000e+00 : f32
    %90 = vector.shape_cast %89 : vector<8x1xi1> to vector<8x1xi1>
    %91 = vector.broadcast %90 : vector<8x1xi1> to vector<8x128xi1>
    %92 = vector.broadcast %cst_21 : f32 to vector<8x128xf32>
    %93 = arith.select %91, %87, %92 : vector<8x128xi1>, vector<8x128xf32>
    %94 = vector.shape_cast %89 : vector<8x1xi1> to vector<8x1xi1>
    %95 = vector.broadcast %94 : vector<8x1xi1> to vector<8x128xi1>
    %96 = arith.select %95, %87, %53 : vector<8x128xi1>, vector<8x128xf32>
    %97 = vector.shape_cast %89 : vector<8x1xi1> to vector<8x1xi1>
    %98 = vector.broadcast %97 : vector<8x1xi1> to vector<8x128xi1>
    %99 = arith.select %98, %85, %56 : vector<8x128xi1>, vector<8x128xf32>
    %c2 = arith.constant 2 : index
    %c0_22 = arith.constant 0 : index
    %c0_23 = arith.constant 0 : index
    %100 = vector.load %arg2[%c2, %c0_22, %c0_23] : memref<8x8x512xbf16, #tpu.memory_space<vmem>>, vector<1x8x512xbf16>
    %101 = vector.shape_cast %100 : vector<1x8x512xbf16> to vector<8x512xbf16>
    %102 = arith.extf %101 : vector<8x512xbf16> to vector<8x512xf32>
    %103 = arith.truncf %96 : vector<8x128xf32> to vector<8x128xbf16>
    %cst_24 = arith.constant dense<0.000000e+00> : vector<8x512xf32>
    %104 = tpu.matmul %103, %4, %cst_24 {dimension_numbers = #tpu.dot_dimension_numbers<[1], [0], [0], [1], [0, 0, 1, 1], [], []>} : vector<8x128xbf16>, vector<128x512xbf16>, vector<8x512xf32> -> vector<8x512xf32>
    %105 = arith.addf %102, %104 : vector<8x512xf32>
    %106 = vector.extract_strided_slice %105 {offsets = [0, 0], sizes = [8, 128], strides = [1, 1]} : vector<8x512xf32> to vector<8x128xf32>
    %107 = arith.negf %106 : vector<8x128xf32>
    %108 = math.exp %107 : vector<8x128xf32>
    %cst_25 = arith.constant 1.000000e+00 : f32
    %109 = vector.broadcast %cst_25 : f32 to vector<8x128xf32>
    %110 = arith.addf %109, %108 : vector<8x128xf32>
    %111 = arith.divf %109, %110 : vector<8x128xf32>
    %112 = vector.extract_strided_slice %105 {offsets = [0, 128], sizes = [8, 128], strides = [1, 1]} : vector<8x512xf32> to vector<8x128xf32>
    %113 = arith.negf %112 : vector<8x128xf32>
    %114 = math.exp %113 : vector<8x128xf32>
    %cst_26 = arith.constant 1.000000e+00 : f32
    %115 = vector.broadcast %cst_26 : f32 to vector<8x128xf32>
    %116 = arith.addf %115, %114 : vector<8x128xf32>
    %117 = arith.divf %115, %116 : vector<8x128xf32>
    %118 = vector.extract_strided_slice %105 {offsets = [0, 256], sizes = [8, 128], strides = [1, 1]} : vector<8x512xf32> to vector<8x128xf32>
    %119 = math.tanh %118 : vector<8x128xf32>
    %120 = vector.extract_strided_slice %105 {offsets = [0, 384], sizes = [8, 128], strides = [1, 1]} : vector<8x512xf32> to vector<8x128xf32>
    %121 = arith.negf %120 : vector<8x128xf32>
    %122 = math.exp %121 : vector<8x128xf32>
    %cst_27 = arith.constant 1.000000e+00 : f32
    %123 = vector.broadcast %cst_27 : f32 to vector<8x128xf32>
    %124 = arith.addf %123, %122 : vector<8x128xf32>
    %125 = arith.divf %123, %124 : vector<8x128xf32>
    %126 = arith.mulf %117, %99 : vector<8x128xf32>
    %127 = arith.mulf %111, %119 : vector<8x128xf32>
    %128 = arith.addf %126, %127 : vector<8x128xf32>
    %129 = math.tanh %128 : vector<8x128xf32>
    %130 = arith.mulf %125, %129 : vector<8x128xf32>
    %131 = vector.extract_strided_slice %11 {offsets = [2, 0, 0], sizes = [1, 8, 1], strides = [1, 1, 1]} : vector<8x8x1xi1> to vector<1x8x1xi1>
    %132 = vector.shape_cast %131 : vector<1x8x1xi1> to vector<8x1xi1>
    %cst_28 = arith.constant 0.000000e+00 : f32
    %133 = vector.shape_cast %132 : vector<8x1xi1> to vector<8x1xi1>
    %134 = vector.broadcast %133 : vector<8x1xi1> to vector<8x128xi1>
    %135 = vector.broadcast %cst_28 : f32 to vector<8x128xf32>
    %136 = arith.select %134, %130, %135 : vector<8x128xi1>, vector<8x128xf32>
    %137 = vector.shape_cast %132 : vector<8x1xi1> to vector<8x1xi1>
    %138 = vector.broadcast %137 : vector<8x1xi1> to vector<8x128xi1>
    %139 = arith.select %138, %130, %96 : vector<8x128xi1>, vector<8x128xf32>
    %140 = vector.shape_cast %132 : vector<8x1xi1> to vector<8x1xi1>
    %141 = vector.broadcast %140 : vector<8x1xi1> to vector<8x128xi1>
    %142 = arith.select %141, %128, %99 : vector<8x128xi1>, vector<8x128xf32>
    %c3 = arith.constant 3 : index
    %c0_29 = arith.constant 0 : index
    %c0_30 = arith.constant 0 : index
    %143 = vector.load %arg2[%c3, %c0_29, %c0_30] : memref<8x8x512xbf16, #tpu.memory_space<vmem>>, vector<1x8x512xbf16>
    %144 = vector.shape_cast %143 : vector<1x8x512xbf16> to vector<8x512xbf16>
    %145 = arith.extf %144 : vector<8x512xbf16> to vector<8x512xf32>
    %146 = arith.truncf %139 : vector<8x128xf32> to vector<8x128xbf16>
    %cst_31 = arith.constant dense<0.000000e+00> : vector<8x512xf32>
    %147 = tpu.matmul %146, %4, %cst_31 {dimension_numbers = #tpu.dot_dimension_numbers<[1], [0], [0], [1], [0, 0, 1, 1], [], []>} : vector<8x128xbf16>, vector<128x512xbf16>, vector<8x512xf32> -> vector<8x512xf32>
    %148 = arith.addf %145, %147 : vector<8x512xf32>
    %149 = vector.extract_strided_slice %148 {offsets = [0, 0], sizes = [8, 128], strides = [1, 1]} : vector<8x512xf32> to vector<8x128xf32>
    %150 = arith.negf %149 : vector<8x128xf32>
    %151 = math.exp %150 : vector<8x128xf32>
    %cst_32 = arith.constant 1.000000e+00 : f32
    %152 = vector.broadcast %cst_32 : f32 to vector<8x128xf32>
    %153 = arith.addf %152, %151 : vector<8x128xf32>
    %154 = arith.divf %152, %153 : vector<8x128xf32>
    %155 = vector.extract_strided_slice %148 {offsets = [0, 128], sizes = [8, 128], strides = [1, 1]} : vector<8x512xf32> to vector<8x128xf32>
    %156 = arith.negf %155 : vector<8x128xf32>
    %157 = math.exp %156 : vector<8x128xf32>
    %cst_33 = arith.constant 1.000000e+00 : f32
    %158 = vector.broadcast %cst_33 : f32 to vector<8x128xf32>
    %159 = arith.addf %158, %157 : vector<8x128xf32>
    %160 = arith.divf %158, %159 : vector<8x128xf32>
    %161 = vector.extract_strided_slice %148 {offsets = [0, 256], sizes = [8, 128], strides = [1, 1]} : vector<8x512xf32> to vector<8x128xf32>
    %162 = math.tanh %161 : vector<8x128xf32>
    %163 = vector.extract_strided_slice %148 {offsets = [0, 384], sizes = [8, 128], strides = [1, 1]} : vector<8x512xf32> to vector<8x128xf32>
    %164 = arith.negf %163 : vector<8x128xf32>
    %165 = math.exp %164 : vector<8x128xf32>
    %cst_34 = arith.constant 1.000000e+00 : f32
    %166 = vector.broadcast %cst_34 : f32 to vector<8x128xf32>
    %167 = arith.addf %166, %165 : vector<8x128xf32>
    %168 = arith.divf %166, %167 : vector<8x128xf32>
    %169 = arith.mulf %160, %142 : vector<8x128xf32>
    %170 = arith.mulf %154, %162 : vector<8x128xf32>
    %171 = arith.addf %169, %170 : vector<8x128xf32>
    %172 = math.tanh %171 : vector<8x128xf32>
    %173 = arith.mulf %168, %172 : vector<8x128xf32>
    %174 = vector.extract_strided_slice %11 {offsets = [3, 0, 0], sizes = [1, 8, 1], strides = [1, 1, 1]} : vector<8x8x1xi1> to vector<1x8x1xi1>
    %175 = vector.shape_cast %174 : vector<1x8x1xi1> to vector<8x1xi1>
    %cst_35 = arith.constant 0.000000e+00 : f32
    %176 = vector.shape_cast %175 : vector<8x1xi1> to vector<8x1xi1>
    %177 = vector.broadcast %176 : vector<8x1xi1> to vector<8x128xi1>
    %178 = vector.broadcast %cst_35 : f32 to vector<8x128xf32>
    %179 = arith.select %177, %173, %178 : vector<8x128xi1>, vector<8x128xf32>
    %180 = vector.shape_cast %175 : vector<8x1xi1> to vector<8x1xi1>
    %181 = vector.broadcast %180 : vector<8x1xi1> to vector<8x128xi1>
    %182 = arith.select %181, %173, %139 : vector<8x128xi1>, vector<8x128xf32>
    %183 = vector.shape_cast %175 : vector<8x1xi1> to vector<8x1xi1>
    %184 = vector.broadcast %183 : vector<8x1xi1> to vector<8x128xi1>
    %185 = arith.select %184, %171, %142 : vector<8x128xi1>, vector<8x128xf32>
    %c4 = arith.constant 4 : index
    %c0_36 = arith.constant 0 : index
    %c0_37 = arith.constant 0 : index
    %186 = vector.load %arg2[%c4, %c0_36, %c0_37] : memref<8x8x512xbf16, #tpu.memory_space<vmem>>, vector<1x8x512xbf16>
    %187 = vector.shape_cast %186 : vector<1x8x512xbf16> to vector<8x512xbf16>
    %188 = arith.extf %187 : vector<8x512xbf16> to vector<8x512xf32>
    %189 = arith.truncf %182 : vector<8x128xf32> to vector<8x128xbf16>
    %cst_38 = arith.constant dense<0.000000e+00> : vector<8x512xf32>
    %190 = tpu.matmul %189, %4, %cst_38 {dimension_numbers = #tpu.dot_dimension_numbers<[1], [0], [0], [1], [0, 0, 1, 1], [], []>} : vector<8x128xbf16>, vector<128x512xbf16>, vector<8x512xf32> -> vector<8x512xf32>
    %191 = arith.addf %188, %190 : vector<8x512xf32>
    %192 = vector.extract_strided_slice %191 {offsets = [0, 0], sizes = [8, 128], strides = [1, 1]} : vector<8x512xf32> to vector<8x128xf32>
    %193 = arith.negf %192 : vector<8x128xf32>
    %194 = math.exp %193 : vector<8x128xf32>
    %cst_39 = arith.constant 1.000000e+00 : f32
    %195 = vector.broadcast %cst_39 : f32 to vector<8x128xf32>
    %196 = arith.addf %195, %194 : vector<8x128xf32>
    %197 = arith.divf %195, %196 : vector<8x128xf32>
    %198 = vector.extract_strided_slice %191 {offsets = [0, 128], sizes = [8, 128], strides = [1, 1]} : vector<8x512xf32> to vector<8x128xf32>
    %199 = arith.negf %198 : vector<8x128xf32>
    %200 = math.exp %199 : vector<8x128xf32>
    %cst_40 = arith.constant 1.000000e+00 : f32
    %201 = vector.broadcast %cst_40 : f32 to vector<8x128xf32>
    %202 = arith.addf %201, %200 : vector<8x128xf32>
    %203 = arith.divf %201, %202 : vector<8x128xf32>
    %204 = vector.extract_strided_slice %191 {offsets = [0, 256], sizes = [8, 128], strides = [1, 1]} : vector<8x512xf32> to vector<8x128xf32>
    %205 = math.tanh %204 : vector<8x128xf32>
    %206 = vector.extract_strided_slice %191 {offsets = [0, 384], sizes = [8, 128], strides = [1, 1]} : vector<8x512xf32> to vector<8x128xf32>
    %207 = arith.negf %206 : vector<8x128xf32>
    %208 = math.exp %207 : vector<8x128xf32>
    %cst_41 = arith.constant 1.000000e+00 : f32
    %209 = vector.broadcast %cst_41 : f32 to vector<8x128xf32>
    %210 = arith.addf %209, %208 : vector<8x128xf32>
    %211 = arith.divf %209, %210 : vector<8x128xf32>
    %212 = arith.mulf %203, %185 : vector<8x128xf32>
    %213 = arith.mulf %197, %205 : vector<8x128xf32>
    %214 = arith.addf %212, %213 : vector<8x128xf32>
    %215 = math.tanh %214 : vector<8x128xf32>
    %216 = arith.mulf %211, %215 : vector<8x128xf32>
    %217 = vector.extract_strided_slice %11 {offsets = [4, 0, 0], sizes = [1, 8, 1], strides = [1, 1, 1]} : vector<8x8x1xi1> to vector<1x8x1xi1>
    %218 = vector.shape_cast %217 : vector<1x8x1xi1> to vector<8x1xi1>
    %cst_42 = arith.constant 0.000000e+00 : f32
    %219 = vector.shape_cast %218 : vector<8x1xi1> to vector<8x1xi1>
    %220 = vector.broadcast %219 : vector<8x1xi1> to vector<8x128xi1>
    %221 = vector.broadcast %cst_42 : f32 to vector<8x128xf32>
    %222 = arith.select %220, %216, %221 : vector<8x128xi1>, vector<8x128xf32>
    %223 = vector.shape_cast %218 : vector<8x1xi1> to vector<8x1xi1>
    %224 = vector.broadcast %223 : vector<8x1xi1> to vector<8x128xi1>
    %225 = arith.select %224, %216, %182 : vector<8x128xi1>, vector<8x128xf32>
    %226 = vector.shape_cast %218 : vector<8x1xi1> to vector<8x1xi1>
    %227 = vector.broadcast %226 : vector<8x1xi1> to vector<8x128xi1>
    %228 = arith.select %227, %214, %185 : vector<8x128xi1>, vector<8x128xf32>
    %c5 = arith.constant 5 : index
    %c0_43 = arith.constant 0 : index
    %c0_44 = arith.constant 0 : index
    %229 = vector.load %arg2[%c5, %c0_43, %c0_44] : memref<8x8x512xbf16, #tpu.memory_space<vmem>>, vector<1x8x512xbf16>
    %230 = vector.shape_cast %229 : vector<1x8x512xbf16> to vector<8x512xbf16>
    %231 = arith.extf %230 : vector<8x512xbf16> to vector<8x512xf32>
    %232 = arith.truncf %225 : vector<8x128xf32> to vector<8x128xbf16>
    %cst_45 = arith.constant dense<0.000000e+00> : vector<8x512xf32>
    %233 = tpu.matmul %232, %4, %cst_45 {dimension_numbers = #tpu.dot_dimension_numbers<[1], [0], [0], [1], [0, 0, 1, 1], [], []>} : vector<8x128xbf16>, vector<128x512xbf16>, vector<8x512xf32> -> vector<8x512xf32>
    %234 = arith.addf %231, %233 : vector<8x512xf32>
    %235 = vector.extract_strided_slice %234 {offsets = [0, 0], sizes = [8, 128], strides = [1, 1]} : vector<8x512xf32> to vector<8x128xf32>
    %236 = arith.negf %235 : vector<8x128xf32>
    %237 = math.exp %236 : vector<8x128xf32>
    %cst_46 = arith.constant 1.000000e+00 : f32
    %238 = vector.broadcast %cst_46 : f32 to vector<8x128xf32>
    %239 = arith.addf %238, %237 : vector<8x128xf32>
    %240 = arith.divf %238, %239 : vector<8x128xf32>
    %241 = vector.extract_strided_slice %234 {offsets = [0, 128], sizes = [8, 128], strides = [1, 1]} : vector<8x512xf32> to vector<8x128xf32>
    %242 = arith.negf %241 : vector<8x128xf32>
    %243 = math.exp %242 : vector<8x128xf32>
    %cst_47 = arith.constant 1.000000e+00 : f32
    %244 = vector.broadcast %cst_47 : f32 to vector<8x128xf32>
    %245 = arith.addf %244, %243 : vector<8x128xf32>
    %246 = arith.divf %244, %245 : vector<8x128xf32>
    %247 = vector.extract_strided_slice %234 {offsets = [0, 256], sizes = [8, 128], strides = [1, 1]} : vector<8x512xf32> to vector<8x128xf32>
    %248 = math.tanh %247 : vector<8x128xf32>
    %249 = vector.extract_strided_slice %234 {offsets = [0, 384], sizes = [8, 128], strides = [1, 1]} : vector<8x512xf32> to vector<8x128xf32>
    %250 = arith.negf %249 : vector<8x128xf32>
    %251 = math.exp %250 : vector<8x128xf32>
    %cst_48 = arith.constant 1.000000e+00 : f32
    %252 = vector.broadcast %cst_48 : f32 to vector<8x128xf32>
    %253 = arith.addf %252, %251 : vector<8x128xf32>
    %254 = arith.divf %252, %253 : vector<8x128xf32>
    %255 = arith.mulf %246, %228 : vector<8x128xf32>
    %256 = arith.mulf %240, %248 : vector<8x128xf32>
    %257 = arith.addf %255, %256 : vector<8x128xf32>
    %258 = math.tanh %257 : vector<8x128xf32>
    %259 = arith.mulf %254, %258 : vector<8x128xf32>
    %260 = vector.extract_strided_slice %11 {offsets = [5, 0, 0], sizes = [1, 8, 1], strides = [1, 1, 1]} : vector<8x8x1xi1> to vector<1x8x1xi1>
    %261 = vector.shape_cast %260 : vector<1x8x1xi1> to vector<8x1xi1>
    %cst_49 = arith.constant 0.000000e+00 : f32
    %262 = vector.shape_cast %261 : vector<8x1xi1> to vector<8x1xi1>
    %263 = vector.broadcast %262 : vector<8x1xi1> to vector<8x128xi1>
    %264 = vector.broadcast %cst_49 : f32 to vector<8x128xf32>
    %265 = arith.select %263, %259, %264 : vector<8x128xi1>, vector<8x128xf32>
    %266 = vector.shape_cast %261 : vector<8x1xi1> to vector<8x1xi1>
    %267 = vector.broadcast %266 : vector<8x1xi1> to vector<8x128xi1>
    %268 = arith.select %267, %259, %225 : vector<8x128xi1>, vector<8x128xf32>
    %269 = vector.shape_cast %261 : vector<8x1xi1> to vector<8x1xi1>
    %270 = vector.broadcast %269 : vector<8x1xi1> to vector<8x128xi1>
    %271 = arith.select %270, %257, %228 : vector<8x128xi1>, vector<8x128xf32>
    %c6 = arith.constant 6 : index
    %c0_50 = arith.constant 0 : index
    %c0_51 = arith.constant 0 : index
    %272 = vector.load %arg2[%c6, %c0_50, %c0_51] : memref<8x8x512xbf16, #tpu.memory_space<vmem>>, vector<1x8x512xbf16>
    %273 = vector.shape_cast %272 : vector<1x8x512xbf16> to vector<8x512xbf16>
    %274 = arith.extf %273 : vector<8x512xbf16> to vector<8x512xf32>
    %275 = arith.truncf %268 : vector<8x128xf32> to vector<8x128xbf16>
    %cst_52 = arith.constant dense<0.000000e+00> : vector<8x512xf32>
    %276 = tpu.matmul %275, %4, %cst_52 {dimension_numbers = #tpu.dot_dimension_numbers<[1], [0], [0], [1], [0, 0, 1, 1], [], []>} : vector<8x128xbf16>, vector<128x512xbf16>, vector<8x512xf32> -> vector<8x512xf32>
    %277 = arith.addf %274, %276 : vector<8x512xf32>
    %278 = vector.extract_strided_slice %277 {offsets = [0, 0], sizes = [8, 128], strides = [1, 1]} : vector<8x512xf32> to vector<8x128xf32>
    %279 = arith.negf %278 : vector<8x128xf32>
    %280 = math.exp %279 : vector<8x128xf32>
    %cst_53 = arith.constant 1.000000e+00 : f32
    %281 = vector.broadcast %cst_53 : f32 to vector<8x128xf32>
    %282 = arith.addf %281, %280 : vector<8x128xf32>
    %283 = arith.divf %281, %282 : vector<8x128xf32>
    %284 = vector.extract_strided_slice %277 {offsets = [0, 128], sizes = [8, 128], strides = [1, 1]} : vector<8x512xf32> to vector<8x128xf32>
    %285 = arith.negf %284 : vector<8x128xf32>
    %286 = math.exp %285 : vector<8x128xf32>
    %cst_54 = arith.constant 1.000000e+00 : f32
    %287 = vector.broadcast %cst_54 : f32 to vector<8x128xf32>
    %288 = arith.addf %287, %286 : vector<8x128xf32>
    %289 = arith.divf %287, %288 : vector<8x128xf32>
    %290 = vector.extract_strided_slice %277 {offsets = [0, 256], sizes = [8, 128], strides = [1, 1]} : vector<8x512xf32> to vector<8x128xf32>
    %291 = math.tanh %290 : vector<8x128xf32>
    %292 = vector.extract_strided_slice %277 {offsets = [0, 384], sizes = [8, 128], strides = [1, 1]} : vector<8x512xf32> to vector<8x128xf32>
    %293 = arith.negf %292 : vector<8x128xf32>
    %294 = math.exp %293 : vector<8x128xf32>
    %cst_55 = arith.constant 1.000000e+00 : f32
    %295 = vector.broadcast %cst_55 : f32 to vector<8x128xf32>
    %296 = arith.addf %295, %294 : vector<8x128xf32>
    %297 = arith.divf %295, %296 : vector<8x128xf32>
    %298 = arith.mulf %289, %271 : vector<8x128xf32>
    %299 = arith.mulf %283, %291 : vector<8x128xf32>
    %300 = arith.addf %298, %299 : vector<8x128xf32>
    %301 = math.tanh %300 : vector<8x128xf32>
    %302 = arith.mulf %297, %301 : vector<8x128xf32>
    %303 = vector.extract_strided_slice %11 {offsets = [6, 0, 0], sizes = [1, 8, 1], strides = [1, 1, 1]} : vector<8x8x1xi1> to vector<1x8x1xi1>
    %304 = vector.shape_cast %303 : vector<1x8x1xi1> to vector<8x1xi1>
    %cst_56 = arith.constant 0.000000e+00 : f32
    %305 = vector.shape_cast %304 : vector<8x1xi1> to vector<8x1xi1>
    %306 = vector.broadcast %305 : vector<8x1xi1> to vector<8x128xi1>
    %307 = vector.broadcast %cst_56 : f32 to vector<8x128xf32>
    %308 = arith.select %306, %302, %307 : vector<8x128xi1>, vector<8x128xf32>
    %309 = vector.shape_cast %304 : vector<8x1xi1> to vector<8x1xi1>
    %310 = vector.broadcast %309 : vector<8x1xi1> to vector<8x128xi1>
    %311 = arith.select %310, %302, %268 : vector<8x128xi1>, vector<8x128xf32>
    %312 = vector.shape_cast %304 : vector<8x1xi1> to vector<8x1xi1>
    %313 = vector.broadcast %312 : vector<8x1xi1> to vector<8x128xi1>
    %314 = arith.select %313, %300, %271 : vector<8x128xi1>, vector<8x128xf32>
    %c7 = arith.constant 7 : index
    %c0_57 = arith.constant 0 : index
    %c0_58 = arith.constant 0 : index
    %315 = vector.load %arg2[%c7, %c0_57, %c0_58] : memref<8x8x512xbf16, #tpu.memory_space<vmem>>, vector<1x8x512xbf16>
    %316 = vector.shape_cast %315 : vector<1x8x512xbf16> to vector<8x512xbf16>
    %317 = arith.extf %316 : vector<8x512xbf16> to vector<8x512xf32>
    %318 = arith.truncf %311 : vector<8x128xf32> to vector<8x128xbf16>
    %cst_59 = arith.constant dense<0.000000e+00> : vector<8x512xf32>
    %319 = tpu.matmul %318, %4, %cst_59 {dimension_numbers = #tpu.dot_dimension_numbers<[1], [0], [0], [1], [0, 0, 1, 1], [], []>} : vector<8x128xbf16>, vector<128x512xbf16>, vector<8x512xf32> -> vector<8x512xf32>
    %320 = arith.addf %317, %319 : vector<8x512xf32>
    %321 = vector.extract_strided_slice %320 {offsets = [0, 0], sizes = [8, 128], strides = [1, 1]} : vector<8x512xf32> to vector<8x128xf32>
    %322 = arith.negf %321 : vector<8x128xf32>
    %323 = math.exp %322 : vector<8x128xf32>
    %cst_60 = arith.constant 1.000000e+00 : f32
    %324 = vector.broadcast %cst_60 : f32 to vector<8x128xf32>
    %325 = arith.addf %324, %323 : vector<8x128xf32>
    %326 = arith.divf %324, %325 : vector<8x128xf32>
    %327 = vector.extract_strided_slice %320 {offsets = [0, 128], sizes = [8, 128], strides = [1, 1]} : vector<8x512xf32> to vector<8x128xf32>
    %328 = arith.negf %327 : vector<8x128xf32>
    %329 = math.exp %328 : vector<8x128xf32>
    %cst_61 = arith.constant 1.000000e+00 : f32
    %330 = vector.broadcast %cst_61 : f32 to vector<8x128xf32>
    %331 = arith.addf %330, %329 : vector<8x128xf32>
    %332 = arith.divf %330, %331 : vector<8x128xf32>
    %333 = vector.extract_strided_slice %320 {offsets = [0, 256], sizes = [8, 128], strides = [1, 1]} : vector<8x512xf32> to vector<8x128xf32>
    %334 = math.tanh %333 : vector<8x128xf32>
    %335 = vector.extract_strided_slice %320 {offsets = [0, 384], sizes = [8, 128], strides = [1, 1]} : vector<8x512xf32> to vector<8x128xf32>
    %336 = arith.negf %335 : vector<8x128xf32>
    %337 = math.exp %336 : vector<8x128xf32>
    %cst_62 = arith.constant 1.000000e+00 : f32
    %338 = vector.broadcast %cst_62 : f32 to vector<8x128xf32>
    %339 = arith.addf %338, %337 : vector<8x128xf32>
    %340 = arith.divf %338, %339 : vector<8x128xf32>
    %341 = arith.mulf %332, %314 : vector<8x128xf32>
    %342 = arith.mulf %326, %334 : vector<8x128xf32>
    %343 = arith.addf %341, %342 : vector<8x128xf32>
    %344 = math.tanh %343 : vector<8x128xf32>
    %345 = arith.mulf %340, %344 : vector<8x128xf32>
    %346 = vector.extract_strided_slice %11 {offsets = [7, 0, 0], sizes = [1, 8, 1], strides = [1, 1, 1]} : vector<8x8x1xi1> to vector<1x8x1xi1>
    %347 = vector.shape_cast %346 : vector<1x8x1xi1> to vector<8x1xi1>
    %cst_63 = arith.constant 0.000000e+00 : f32
    %348 = vector.shape_cast %347 : vector<8x1xi1> to vector<8x1xi1>
    %349 = vector.broadcast %348 : vector<8x1xi1> to vector<8x128xi1>
    %350 = vector.broadcast %cst_63 : f32 to vector<8x128xf32>
    %351 = arith.select %349, %345, %350 : vector<8x128xi1>, vector<8x128xf32>
    %352 = vector.shape_cast %347 : vector<8x1xi1> to vector<8x1xi1>
    %353 = vector.broadcast %352 : vector<8x1xi1> to vector<8x128xi1>
    %354 = arith.select %353, %345, %311 : vector<8x128xi1>, vector<8x128xf32>
    %355 = vector.shape_cast %347 : vector<8x1xi1> to vector<8x1xi1>
    %356 = vector.broadcast %355 : vector<8x1xi1> to vector<8x128xi1>
    %357 = arith.select %356, %343, %314 : vector<8x128xi1>, vector<8x128xf32>
    %c0_64 = arith.constant 0 : index
    %c0_65 = arith.constant 0 : index
    %358 = vector.load %arg8[%c0_64, %c0_65] : memref<8x128xf32, #tpu.memory_space<vmem>>, vector<8x128xf32>
    tpu.vector_store %arg8[%c0_64, %c0_65], %354 {strides = array<i32>} : memref<8x128xf32, #tpu.memory_space<vmem>>, vector<8x128xf32>,
    %c0_66 = arith.constant 0 : index
    %c0_67 = arith.constant 0 : index
    %359 = vector.load %arg9[%c0_66, %c0_67] : memref<8x128xf32, #tpu.memory_space<vmem>>, vector<8x128xf32>
    tpu.vector_store %arg9[%c0_66, %c0_67], %357 {strides = array<i32>} : memref<8x128xf32, #tpu.memory_space<vmem>>, vector<8x128xf32>,
    %360 = vector.shape_cast %50 : vector<8x128xf32> to vector<8x1x128xf32>
    %361 = vector.shape_cast %93 : vector<8x128xf32> to vector<8x1x128xf32>
    %362 = vector.shape_cast %136 : vector<8x128xf32> to vector<8x1x128xf32>
    %363 = vector.shape_cast %179 : vector<8x128xf32> to vector<8x1x128xf32>
    %364 = vector.shape_cast %222 : vector<8x128xf32> to vector<8x1x128xf32>
    %365 = vector.shape_cast %265 : vector<8x128xf32> to vector<8x1x128xf32>
    %366 = vector.shape_cast %308 : vector<8x128xf32> to vector<8x1x128xf32>
    %367 = vector.shape_cast %351 : vector<8x128xf32> to vector<8x1x128xf32>
    %368 = tpu.concatenate %360, %361, %362, %363, %364, %365, %366, %367 in 1 : vector<8x1x128xf32>, vector<8x1x128xf32>, vector<8x1x128xf32>, vector<8x1x128xf32>, vector<8x1x128xf32>, vector<8x1x128xf32>, vector<8x1x128xf32>, vector<8x1x128xf32> -> vector<8x8x128xf32>
    %369 = arith.truncf %368 : vector<8x8x128xf32> to vector<8x8x128xbf16>
    %c0_68 = arith.constant 0 : index
    %c0_69 = arith.constant 0 : index
    %c0_70 = arith.constant 0 : index
    %370 = vector.load %arg5[%c0_68, %c0_69, %c0_70] : memref<8x8x128xbf16, #tpu.memory_space<vmem>>, vector<8x8x128xbf16>
    tpu.vector_store %arg5[%c0_68, %c0_69, %c0_70], %369 {strides = array<i32>} : memref<8x8x128xbf16, #tpu.memory_space<vmem>>, vector<8x8x128xbf16>,
    %c0_i32_71 = arith.constant 0 : i32
    %371 = arith.cmpi eq, %arg1, %c0_i32_71 : i32
    %372 = arith.extui %371 : i1 to i32
    %c0_i32_72 = arith.constant 0 : i32
    %373 = arith.cmpi ne, %372, %c0_i32_72 : i32
    scf.if %373 {
      %c0_73 = arith.constant 0 : index
      %c0_74 = arith.constant 0 : index
      %c0_75 = arith.constant 0 : index
      %374 = vector.load %arg6[%c0_73, %c0_74, %c0_75] : memref<1x8x128xf32, #tpu.memory_space<vmem>>, vector<1x8x128xf32>
      %375 = vector.shape_cast %374 : vector<1x8x128xf32> to vector<8x128xf32>
      %376 = vector.shape_cast %354 : vector<8x128xf32> to vector<1x8x128xf32>
      tpu.vector_store %arg6[%c0_73, %c0_74, %c0_75], %376 {strides = array<i32>} : memref<1x8x128xf32, #tpu.memory_space<vmem>>, vector<1x8x128xf32>,
      %c0_76 = arith.constant 0 : index
      %c0_77 = arith.constant 0 : index
      %c0_78 = arith.constant 0 : index
      %377 = vector.load %arg7[%c0_76, %c0_77, %c0_78] : memref<1x8x128xf32, #tpu.memory_space<vmem>>, vector<1x8x128xf32>
      %378 = vector.shape_cast %377 : vector<1x8x128xf32> to vector<8x128xf32>
      %379 = vector.shape_cast %357 : vector<8x128xf32> to vector<1x8x128xf32>
      tpu.vector_store %arg7[%c0_76, %c0_77, %c0_78], %379 {strides = array<i32>} : memref<1x8x128xf32, #tpu.memory_space<vmem>>, vector<1x8x128xf32>,
    } else {
    }
    return
  }
  func.func @transform_0(%arg0: i32, %arg1: i32) -> (i32, i32, i32) {
    %c0_i32 = arith.constant 0 : i32
    %c0_i32_0 = arith.constant 0 : i32
    return %arg1, %arg0, %c0_i32 : i32, i32, i32
  }
  func.func @transform_1(%arg0: i32, %arg1: i32) -> (i32, i32) {
    %c0_i32 = arith.constant 0 : i32
    %c0_i32_0 = arith.constant 0 : i32
    return %arg0, %c0_i32 : i32, i32
  }
  func.func @transform_3(%arg0: i32, %arg1: i32) -> (i32, i32, i32) {
    %c0_i32 = arith.constant 0 : i32
    %c0_i32_0 = arith.constant 0 : i32
    return %arg0, %arg1, %c0_i32 : i32, i32, i32
  }
  func.func @transform_4(%arg0: i32, %arg1: i32) -> (i32, i32, i32) {
    %c0_i32 = arith.constant 0 : i32
    %c0_i32_0 = arith.constant 0 : i32
    %c0_i32_1 = arith.constant 0 : i32
    return %c0_i32, %arg0, %c0_i32_0 : i32, i32, i32
  }
  func.func @transform_5(%arg0: i32, %arg1: i32) -> (i32, i32, i32) {
    %c0_i32 = arith.constant 0 : i32
    %c0_i32_0 = arith.constant 0 : i32
    %c0_i32_1 = arith.constant 0 : i32
    return %c0_i32, %arg0, %c0_i32_0 : i32, i32, i32
  }
}

</mosaic_0001>

<llo_original>
// kernel: encoder_forward.1
$region0: #{encoder_forward.1}
  #allocation0 [shape = 'u32[]', space=smem, size = 0x4, offset = 0x4, fixed_abs, tag = 'smem constant byte address 0x4 - core index']
  #allocation1 [shape = 'u32[144,128]{1,0:T(1,128)}', space=vmem, size = 0x12000, scoped, tag = 'internal scratch']
  #allocation2 [shape = 'f32[8,128]{1,0:T(8,128)}', space=vmem, size = 0x1000, scoped, tag = 'scratch operand']
  #allocation3 [shape = 'f32[8,128]{1,0:T(8,128)}', space=vmem, size = 0x1000, scoped, tag = 'scratch operand']
  #allocation4 [shape = 'bf16[128,512]{1,0:T(8,128)(2,1)}', space=vmem, size = 0x20000, scoped, tag = 'scratch operand']
  #allocation5 [shape = 's32[1]{0}', space=sflag, size = 0x4, scoped, tag = 'scratch operand']
  #allocation6 [shape = 's32[]', space=sflag, size = 0x4, offset = 0, fixed_abs, tag = 'sflag constant byte address 0x0 - dummy sync flag']
  %s0 = inlined_call_operand.vmem [shape: bf16[8,8,512], index: 0, kind: input, shape index: {}]
  %s1 = inlined_call_operand.vmem [shape: s32[8,1], index: 1, kind: input, shape index: {}]
  %s2 = inlined_call_operand.vmem [shape: bf16[128,512], index: 2, kind: input, shape index: {}]
  %s3 = inlined_call_operand.vmem [shape: bf16[8,8,128], index: 3, kind: output, shape index: {0}]
  %s4 = inlined_call_operand.vmem [shape: f32[1,8,128], index: 4, kind: output, shape index: {1}]
  %s5 = inlined_call_operand.vmem [shape: f32[1,8,128], index: 5, kind: output, shape index: {2}]
  %6 = xla_tuple %s3, %s4, %s5
  %s7 = sld [smem:[#allocation0]]
  $region76: #{encoder_forward.1} parent=0
    _
  %s9 = ssub.s32 1, %s7
  %s10 = scalar_select 0, %s9, %s7
  // Predicated region
  $region2: #{encoder_forward.1} parent=0 // pred_check
    _
  $region3: #{encoder_forward.1} parent=0 // pred_check_branch
    %12 = sbr.rel (0) target = $region5
  $region4: #{encoder_forward.1} parent=0 // pred_region
    _
  $region5: #{encoder_forward.1} parent=0 // pred_fallthru
    _
  // Predicated region
  $region6: #{encoder_forward.1} parent=0 // pred_check
    _
  $region7: #{encoder_forward.1} parent=0 // pred_check_branch
    %14 = sbr.rel (0) target = $region9
  $region8: #{encoder_forward.1} parent=0 // pred_region
    _
  $region9: #{encoder_forward.1} parent=0 // pred_fallthru
    _
  %p16 = scmp.eq.s32.totalorder 0, 0
  // Predicated region
  $region10: #{encoder_forward.1} parent=0 // pred_check
    %p17 = pneg %p16
  $region11: #{encoder_forward.1} parent=0 // pred_check_branch
    %19 = sbr.rel (%p17) target = $region13
  $region12: #{encoder_forward.1} parent=0 // pred_region
    %p21 = scmp.lt.u32.totalorder 256, 8
    %p22 = pneg %p21
    // Predicated region
    $region14: #{encoder_forward.1} parent=12 // pred_check
      _
    $region15: #{encoder_forward.1} parent=12 // pred_check_branch
      %24 = sbr.rel (%p21) target = $region17
    $region16: #{encoder_forward.1} parent=12 // pred_region
      %s40 = sand.u32 256, 7
      %p41 = scmp.eq.s32.totalorder %s40, 0
      // Predicated region
      $region29: #{encoder_forward.1} parent=16 // pred_check
        %p42 = pneg %p41
      $region30: #{encoder_forward.1} parent=16 // pred_check_branch
        %44 = sbr.rel (%p42) target = $region32
      $region31: #{encoder_forward.1} parent=16 // pred_region
        loop: start=0, step=1, limit=1
        $region33: #{encoder_forward.1} parent=31 // loop_pre_header
          _
        $region34: #{encoder_forward.1} parent=31 // loop_header
          %s46 = sphi 0, %s50
          %p47 = scmp.ge.s32.totalorder %s46, 1
          %s51 = sphi %s2, %s2
          %s52 = sphi [#allocation4], [#allocation4]
        $region35: #{encoder_forward.1} parent=31 // loop_header_branch
          %49 = sbr.rel (%p47) target = $region39
        $region36: #{encoder_forward.1} parent=31 // loop_body
          %v53 = vld [vmem:[%s51] sm:$0xff]
          %54 = vst [vmem:[%s52] sm:$0xff] %v53
          %v55 = vld [vmem:[%s51 + $0x8] sm:$0xff]
          %56 = vst [vmem:[%s52 + $0x8] sm:$0xff] %v55
          %v57 = vld [vmem:[%s51 + $0x10] sm:$0xff]
          %58 = vst [vmem:[%s52 + $0x10] sm:$0xff] %v57
          %v59 = vld [vmem:[%s51 + $0x18] sm:$0xff]
          %60 = vst [vmem:[%s52 + $0x18] sm:$0xff] %v59
          %v61 = vld [vmem:[%s51 + $0x20] sm:$0xff]
          %62 = vst [vmem:[%s52 + $0x20] sm:$0xff] %v61
          %v63 = vld [vmem:[%s51 + $0x28] sm:$0xff]
          %64 = vst [vmem:[%s52 + $0x28] sm:$0xff] %v63
          %v65 = vld [vmem:[%s51 + $0x30] sm:$0xff]
          %66 = vst [vmem:[%s52 + $0x30] sm:$0xff] %v65
          %v67 = vld [vmem:[%s51 + $0x38] sm:$0xff]
          %68 = vst [vmem:[%s52 + $0x38] sm:$0xff] %v67
          %v69 = vld [vmem:[%s51 + $0x40] sm:$0xff]
          %70 = vst [vmem:[%s52 + $0x40] sm:$0xff] %v69
          %v71 = vld [vmem:[%s51 + $0x48] sm:$0xff]
          %72 = vst [vmem:[%s52 + $0x48] sm:$0xff] %v71
          %v73 = vld [vmem:[%s51 + $0x50] sm:$0xff]
          %74 = vst [vmem:[%s52 + $0x50] sm:$0xff] %v73
          %v75 = vld [vmem:[%s51 + $0x58] sm:$0xff]
          %76 = vst [vmem:[%s52 + $0x58] sm:$0xff] %v75
          %v77 = vld [vmem:[%s51 + $0x60] sm:$0xff]
          %78 = vst [vmem:[%s52 + $0x60] sm:$0xff] %v77
          %v79 = vld [vmem:[%s51 + $0x68] sm:$0xff]
          %80 = vst [vmem:[%s52 + $0x68] sm:$0xff] %v79
          %v81 = vld [vmem:[%s51 + $0x70] sm:$0xff]
          %82 = vst [vmem:[%s52 + $0x70] sm:$0xff] %v81
          %v83 = vld [vmem:[%s51 + $0x78] sm:$0xff]
          %84 = vst [vmem:[%s52 + $0x78] sm:$0xff] %v83
          %v85 = vld [vmem:[%s51 + $0x80] sm:$0xff]
          %86 = vst [vmem:[%s52 + $0x80] sm:$0xff] %v85
          %v87 = vld [vmem:[%s51 + $0x88] sm:$0xff]
          %88 = vst [vmem:[%s52 + $0x88] sm:$0xff] %v87
          %v89 = vld [vmem:[%s51 + $0x90] sm:$0xff]
          %90 = vst [vmem:[%s52 + $0x90] sm:$0xff] %v89
          %v91 = vld [vmem:[%s51 + $0x98] sm:$0xff]
          %92 = vst [vmem:[%s52 + $0x98] sm:$0xff] %v91
          %v93 = vld [vmem:[%s51 + $0xa0] sm:$0xff]
          %94 = vst [vmem:[%s52 + $0xa0] sm:$0xff] %v93
          %v95 = vld [vmem:[%s51 + $0xa8] sm:$0xff]
          %96 = vst [vmem:[%s52 + $0xa8] sm:$0xff] %v95
          %v97 = vld [vmem:[%s51 + $0xb0] sm:$0xff]
          %98 = vst [vmem:[%s52 + $0xb0] sm:$0xff] %v97
          %v99 = vld [vmem:[%s51 + $0xb8] sm:$0xff]
          %100 = vst [vmem:[%s52 + $0xb8] sm:$0xff] %v99
          %v101 = vld [vmem:[%s51 + $0xc0] sm:$0xff]
          %102 = vst [vmem:[%s52 + $0xc0] sm:$0xff] %v101
          %v103 = vld [vmem:[%s51 + $0xc8] sm:$0xff]
          %104 = vst [vmem:[%s52 + $0xc8] sm:$0xff] %v103
          %v105 = vld [vmem:[%s51 + $0xd0] sm:$0xff]
          %106 = vst [vmem:[%s52 + $0xd0] sm:$0xff] %v105
          %v107 = vld [vmem:[%s51 + $0xd8] sm:$0xff]
          %108 = vst [vmem:[%s52 + $0xd8] sm:$0xff] %v107
          %v109 = vld [vmem:[%s51 + $0xe0] sm:$0xff]
          %110 = vst [vmem:[%s52 + $0xe0] sm:$0xff] %v109
          %v111 = vld [vmem:[%s51 + $0xe8] sm:$0xff]
          %112 = vst [vmem:[%s52 + $0xe8] sm:$0xff] %v111
          %v113 = vld [vmem:[%s51 + $0xf0] sm:$0xff]
          %114 = vst [vmem:[%s52 + $0xf0] sm:$0xff] %v113
          %v115 = vld [vmem:[%s51 + $0xf8] sm:$0xff]
          %116 = vst [vmem:[%s52 + $0xf8] sm:$0xff] %v115
        $region37: #{encoder_forward.1} parent=31 // loop_footer
          %s50 = sadd.s32 1, %s46
        $region38: #{encoder_forward.1} parent=31 // loop_footer_branch
          %45 = sbr.rel target = $region34
        $region39: #{encoder_forward.1} parent=31 // loop_exit
          _
      $region32: #{encoder_forward.1} parent=16 // pred_fallthru
        _
      %p117 = pneg %p41
      // Predicated region
      $region40: #{encoder_forward.1} parent=16 // pred_check
        _
      $region41: #{encoder_forward.1} parent=16 // pred_check_branch
        %119 = sbr.rel (%p41) target = $region43
      $region42: #{encoder_forward.1} parent=16 // pred_region
        %s120 = sand.u32 256, 7
      $region43: #{encoder_forward.1} parent=16 // pred_fallthru
        _
    $region17: #{encoder_forward.1} parent=12 // pred_fallthru
      _
    // Predicated region
    $region18: #{encoder_forward.1} parent=12 // pred_check
      %p25 = pneg %p21
    $region19: #{encoder_forward.1} parent=12 // pred_check_branch
      %27 = sbr.rel (%p25) target = $region21
    $region20: #{encoder_forward.1} parent=12 // pred_region
      %s28 = sshll.u32 1, 256
      %s29 = ssub.s32 %s28, 1
      loop: start=0, step=1, limit=1
      $region22: #{encoder_forward.1} parent=20 // loop_pre_header
        _
      $region23: #{encoder_forward.1} parent=20 // loop_header
        %s31 = sphi 0, %s35
        %p32 = scmp.ge.s32.totalorder %s31, 1
        %s36 = sphi %s2, %s2
        %s37 = sphi [#allocation4], [#allocation4]
      $region24: #{encoder_forward.1} parent=20 // loop_header_branch
        %34 = sbr.rel (%p32) target = $region28
      $region25: #{encoder_forward.1} parent=20 // loop_body
        %v38 = vld [vmem:[%s36] sm:%s29]
        %39 = vst [vmem:[%s37] sm:%s29] %v38
      $region26: #{encoder_forward.1} parent=20 // loop_footer
        %s35 = sadd.s32 1, %s31
      $region27: #{encoder_forward.1} parent=20 // loop_footer_branch
        %30 = sbr.rel target = $region23
      $region28: #{encoder_forward.1} parent=20 // loop_exit
        _
    $region21: #{encoder_forward.1} parent=12 // pred_fallthru
      _
    // Predicated region
    $region44: #{encoder_forward.1} parent=12 // pred_check
      _
    $region45: #{encoder_forward.1} parent=12 // pred_check_branch
      %123 = sbr.rel (0) target = $region47
    $region46: #{encoder_forward.1} parent=12 // pred_region
      %124 = vsyncadd [#allocation5], 4096
    $region47: #{encoder_forward.1} parent=12 // pred_fallthru
      _
    %s125 = smul.u32 4, 16
    %s126 = smul.u32 %s125, 4
    %s127 = sshll.u32 %s126, 4
    %128 = dma.done [#allocation5], %s127
    %129 = vst [vmem:[#allocation2] sm:$0xff] 0.0
    %130 = vst [vmem:[#allocation3] sm:$0xff] 0.0
  $region13: #{encoder_forward.1} parent=0 // pred_fallthru
    _
  %v131 = vld [vmem:[%s1] sm:$0xff]
  %v132 = vld [vmem:[#allocation4] sm:$0xff]
  %v133 = vld [vmem:[#allocation4 + $0x8] sm:$0xff]
  %v134 = vld [vmem:[#allocation4 + $0x10] sm:$0xff]
  %v135 = vld [vmem:[#allocation4 + $0x18] sm:$0xff]
  %v136 = vld [vmem:[#allocation4 + $0x20] sm:$0xff]
  %v137 = vld [vmem:[#allocation4 + $0x28] sm:$0xff]
  %v138 = vld [vmem:[#allocation4 + $0x30] sm:$0xff]
  %v139 = vld [vmem:[#allocation4 + $0x38] sm:$0xff]
  %v140 = vld [vmem:[#allocation4 + $0x40] sm:$0xff]
  %v141 = vld [vmem:[#allocation4 + $0x48] sm:$0xff]
  %v142 = vld [vmem:[#allocation4 + $0x50] sm:$0xff]
  %v143 = vld [vmem:[#allocation4 + $0x58] sm:$0xff]
  %v144 = vld [vmem:[#allocation4 + $0x60] sm:$0xff]
  %v145 = vld [vmem:[#allocation4 + $0x68] sm:$0xff]
  %v146 = vld [vmem:[#allocation4 + $0x70] sm:$0xff]
  %v147 = vld [vmem:[#allocation4 + $0x78] sm:$0xff]
  %v148 = vld [vmem:[#allocation4 + $0x80] sm:$0xff]
  %v149 = vld [vmem:[#allocation4 + $0x88] sm:$0xff]
  %v150 = vld [vmem:[#allocation4 + $0x90] sm:$0xff]
  %v151 = vld [vmem:[#allocation4 + $0x98] sm:$0xff]
  %v152 = vld [vmem:[#allocation4 + $0xa0] sm:$0xff]
  %v153 = vld [vmem:[#allocation4 + $0xa8] sm:$0xff]
  %v154 = vld [vmem:[#allocation4 + $0xb0] sm:$0xff]
  %v155 = vld [vmem:[#allocation4 + $0xb8] sm:$0xff]
  %v156 = vld [vmem:[#allocation4 + $0xc0] sm:$0xff]
  %v157 = vld [vmem:[#allocation4 + $0xc8] sm:$0xff]
  %v158 = vld [vmem:[#allocation4 + $0xd0] sm:$0xff]
  %v159 = vld [vmem:[#allocation4 + $0xd8] sm:$0xff]
  %v160 = vld [vmem:[#allocation4 + $0xe0] sm:$0xff]
  %v161 = vld [vmem:[#allocation4 + $0xe8] sm:$0xff]
  %v162 = vld [vmem:[#allocation4 + $0xf0] sm:$0xff]
  %v163 = vld [vmem:[#allocation4 + $0xf8] sm:$0xff]
  %s164 = smul.u32 0, 8
  %v165 = vstv %s164
  %v166 = vadd.s32 %v165, 1
  %v167 = vadd.s32 %v165, 2
  %v168 = vadd.s32 %v165, 3
  %v169 = vadd.s32 %v165, 4
  %v170 = vadd.s32 %v165, 5
  %v171 = vadd.s32 %v165, 6
  %v172 = vadd.s32 %v165, 7
  %vm173 = vcmp.gt.s32.totalorder %v131, %v165
  %vm174 = vcmp.gt.s32.totalorder %v131, %v166
  %vm175 = vcmp.gt.s32.totalorder %v131, %v167
  %vm176 = vcmp.gt.s32.totalorder %v131, %v168
  %vm177 = vcmp.gt.s32.totalorder %v131, %v169
  %vm178 = vcmp.gt.s32.totalorder %v131, %v170
  %vm179 = vcmp.gt.s32.totalorder %v131, %v171
  %vm180 = vcmp.gt.s32.totalorder %v131, %v172
  %v181 = vld [vmem:[#allocation2] sm:$0xff]
  %v182 = vld [vmem:[#allocation3] sm:$0xff]
  %v183 = vld [vmem:[%s0] sm:$0xff]
  %v184 = vld [vmem:[%s0 + $0x8] sm:$0xff]
  %v185 = vunpack.c.l.bf16 %v183
  %v186 = vunpack.c.h.bf16 %v183
  %v187 = vunpack.c.l.bf16 %v184
  %v188 = vunpack.c.h.bf16 %v184
  %v189 = vpack.c.bf16 %v181, %v181
  %v222 = vunpack.c.l.b16 %v132
  %v223 = vunpack.c.h.b16 %v132
  %v224 = vunpack.c.l.b16 %v133
  %v225 = vunpack.c.h.b16 %v133
  %v226 = vunpack.c.l.b16 %v134
  %v227 = vunpack.c.h.b16 %v134
  %v228 = vunpack.c.l.b16 %v135
  %v229 = vunpack.c.h.b16 %v135
  %v230 = vunpack.c.l.b16 %v136
  %v231 = vunpack.c.h.b16 %v136
  %v232 = vunpack.c.l.b16 %v137
  %v233 = vunpack.c.h.b16 %v137
  %v234 = vunpack.c.l.b16 %v138
  %v235 = vunpack.c.h.b16 %v138
  %v236 = vunpack.c.l.b16 %v139
  %v237 = vunpack.c.h.b16 %v139
  %v238 = vunpack.c.l.b16 %v140
  %v239 = vunpack.c.h.b16 %v140
  %v240 = vunpack.c.l.b16 %v141
  %v241 = vunpack.c.h.b16 %v141
  %v242 = vunpack.c.l.b16 %v142
  %v243 = vunpack.c.h.b16 %v142
  %v244 = vunpack.c.l.b16 %v143
  %v245 = vunpack.c.h.b16 %v143
  %v246 = vunpack.c.l.b16 %v144
  %v247 = vunpack.c.h.b16 %v144
  %v248 = vunpack.c.l.b16 %v145
  %v249 = vunpack.c.h.b16 %v145
  %v250 = vunpack.c.l.b16 %v146
  %v251 = vunpack.c.h.b16 %v146
  %v252 = vunpack.c.l.b16 %v147
  %v253 = vunpack.c.h.b16 %v147
  %v254 = vunpack.c.l.b16 %v148
  %v255 = vunpack.c.h.b16 %v148
  %v256 = vunpack.c.l.b16 %v149
  %v257 = vunpack.c.h.b16 %v149
  %v258 = vunpack.c.l.b16 %v150
  %v259 = vunpack.c.h.b16 %v150
  %v260 = vunpack.c.l.b16 %v151
  %v261 = vunpack.c.h.b16 %v151
  %v262 = vunpack.c.l.b16 %v152
  %v263 = vunpack.c.h.b16 %v152
  %v264 = vunpack.c.l.b16 %v153
  %v265 = vunpack.c.h.b16 %v153
  %v266 = vunpack.c.l.b16 %v154
  %v267 = vunpack.c.h.b16 %v154
  %v268 = vunpack.c.l.b16 %v155
  %v269 = vunpack.c.h.b16 %v155
  %v270 = vunpack.c.l.b16 %v156
  %v271 = vunpack.c.h.b16 %v156
  %v272 = vunpack.c.l.b16 %v157
  %v273 = vunpack.c.h.b16 %v157
  %v274 = vunpack.c.l.b16 %v158
  %v275 = vunpack.c.h.b16 %v158
  %v276 = vunpack.c.l.b16 %v159
  %v277 = vunpack.c.h.b16 %v159
  %v278 = vunpack.c.l.b16 %v160
  %v279 = vunpack.c.h.b16 %v160
  %v280 = vunpack.c.l.b16 %v161
  %v281 = vunpack.c.h.b16 %v161
  %v282 = vunpack.c.l.b16 %v162
  %v283 = vunpack.c.h.b16 %v162
  %v284 = vunpack.c.l.b16 %v163
  %v285 = vunpack.c.h.b16 %v163
  %v286 = vpack.c.b16 %v226, %v222
  %v287 = vpack.c.b16 %v227, %v223
  %v288 = vpack.c.b16 %v228, %v224
  %v289 = vpack.c.b16 %v229, %v225
  %v290 = vpack.c.b16 %v234, %v230
  %v291 = vpack.c.b16 %v235, %v231
  %v292 = vpack.c.b16 %v236, %v232
  %v293 = vpack.c.b16 %v237, %v233
  %v294 = vpack.c.b16 %v242, %v238
  %v295 = vpack.c.b16 %v243, %v239
  %v296 = vpack.c.b16 %v244, %v240
  %v297 = vpack.c.b16 %v245, %v241
  %v298 = vpack.c.b16 %v250, %v246
  %v299 = vpack.c.b16 %v251, %v247
  %v300 = vpack.c.b16 %v252, %v248
  %v301 = vpack.c.b16 %v253, %v249
  %v302 = vpack.c.b16 %v258, %v254
  %v303 = vpack.c.b16 %v259, %v255
  %v304 = vpack.c.b16 %v260, %v256
  %v305 = vpack.c.b16 %v261, %v257
  %v306 = vpack.c.b16 %v266, %v262
  %v307 = vpack.c.b16 %v267, %v263
  %v308 = vpack.c.b16 %v268, %v264
  %v309 = vpack.c.b16 %v269, %v265
  %v310 = vpack.c.b16 %v274, %v270
  %v311 = vpack.c.b16 %v275, %v271
  %v312 = vpack.c.b16 %v276, %v272
  %v313 = vpack.c.b16 %v277, %v273
  %v314 = vpack.c.b16 %v282, %v278
  %v315 = vpack.c.b16 %v283, %v279
  %v316 = vpack.c.b16 %v284, %v280
  %v317 = vpack.c.b16 %v285, %v281
  %350 = vmatprep.subr.bf16.mxu0 %v315
  %351 = vmatpush1.bf16.msra.mxu0 %v314
  %352 = vmatprep.subr.bf16.mxu0 %v311
  %353 = vmatpush1.bf16.msra.mxu0 %v310
  %354 = vmatprep.subr.bf16.mxu0 %v307
  %355 = vmatpush1.bf16.msra.mxu0 %v306
  %356 = vmatprep.subr.bf16.mxu0 %v303
  %357 = vmatpush1.bf16.msra.mxu0 %v302
  %358 = vmatprep.subr.bf16.mxu0 %v299
  %359 = vmatpush1.bf16.msra.mxu0 %v298
  %360 = vmatprep.subr.bf16.mxu0 %v295
  %361 = vmatpush1.bf16.msra.mxu0 %v294
  %362 = vmatprep.subr.bf16.mxu0 %v291
  %363 = vmatpush1.bf16.msra.mxu0 %v290
  %364 = vmatprep.subr.bf16.mxu0 %v287
  %365 = vmatpush1.bf16.msra.mxu0 %v286
  %366 = vmatprep.subr.bf16.mxu0 0
  %367 = vmatpush2.bf16.msra.mxu0 0
  %368 = vmatprep.subr.bf16.mxu0 0
  %369 = vmatpush2.bf16.msra.mxu0 0
  %370 = vmatprep.subr.bf16.mxu0 0
  %371 = vmatpush2.bf16.msra.mxu0 0
  %372 = vmatprep.subr.bf16.mxu0 0
  %373 = vmatpush2.bf16.msra.mxu0 0
  %374 = vmatprep.subr.bf16.mxu0 0
  %375 = vmatpush2.bf16.msra.mxu0 0
  %376 = vmatprep.subr.bf16.mxu0 0
  %377 = vmatpush2.bf16.msra.mxu0 0
  %378 = vmatprep.subr.bf16.mxu0 0
  %379 = vmatpush2.bf16.msra.mxu0 0
  %380 = vmatprep.subr.bf16.mxu0 0
  %381 = vmatpush2.bf16.msra.mxu0 0
  %382 = vmatprep.mubr.bf16.mxu0 0
  %383 = vmatmul.mubr.bf16.gmra.mxu0 %v189
  %v384 = vpop.f32.mrf.mxu0
  %v385 = vadd.f32 0.0, %v384
  %v386 = vpop.f32.mrf.mxu0
  %v387 = vadd.f32 0.0, %v386
  %v388 = vpop.f32.mrf.mxu0
  %v389 = vpop.f32.mrf.mxu0
  %390 = vdwg.mxu0
  %391 = vmatprep.subr.bf16.mxu0 %v317
  %392 = vmatpush1.bf16.msra.mxu0 %v316
  %393 = vmatprep.subr.bf16.mxu0 %v313
  %394 = vmatpush1.bf16.msra.mxu0 %v312
  %395 = vmatprep.subr.bf16.mxu0 %v309
  %396 = vmatpush1.bf16.msra.mxu0 %v308
  %397 = vmatprep.subr.bf16.mxu0 %v305
  %398 = vmatpush1.bf16.msra.mxu0 %v304
  %399 = vmatprep.subr.bf16.mxu0 %v301
  %400 = vmatpush1.bf16.msra.mxu0 %v300
  %401 = vmatprep.subr.bf16.mxu0 %v297
  %402 = vmatpush1.bf16.msra.mxu0 %v296
  %403 = vmatprep.subr.bf16.mxu0 %v293
  %404 = vmatpush1.bf16.msra.mxu0 %v292
  %405 = vmatprep.subr.bf16.mxu0 %v289
  %406 = vmatpush1.bf16.msra.mxu0 %v288
  %407 = vmatprep.subr.bf16.mxu0 0
  %408 = vmatpush2.bf16.msra.mxu0 0
  %409 = vmatprep.subr.bf16.mxu0 0
  %410 = vmatpush2.bf16.msra.mxu0 0
  %411 = vmatprep.subr.bf16.mxu0 0
  %412 = vmatpush2.bf16.msra.mxu0 0
  %413 = vmatprep.subr.bf16.mxu0 0
  %414 = vmatpush2.bf16.msra.mxu0 0
  %415 = vmatprep.subr.bf16.mxu0 0
  %416 = vmatpush2.bf16.msra.mxu0 0
  %417 = vmatprep.subr.bf16.mxu0 0
  %418 = vmatpush2.bf16.msra.mxu0 0
  %419 = vmatprep.subr.bf16.mxu0 0
  %420 = vmatpush2.bf16.msra.mxu0 0
  %421 = vmatprep.subr.bf16.mxu0 0
  %422 = vmatpush2.bf16.msra.mxu0 0
  %423 = vmatprep.mubr.bf16.mxu0 0
  %424 = vmatmul.mubr.bf16.gmra.mxu0 %v189
  %v425 = vpop.f32.mrf.mxu0
  %v426 = vadd.f32 0.0, %v425
  %v427 = vpop.f32.mrf.mxu0
  %v428 = vadd.f32 0.0, %v427
  %v429 = vpop.f32.mrf.mxu0
  %v430 = vpop.f32.mrf.mxu0
  %431 = vdwg.mxu0
  %v432 = vadd.f32 %v185, %v385
  %v433 = vadd.f32 %v186, %v387
  %v434 = vadd.f32 %v187, %v426
  %v435 = vadd.f32 %v188, %v428
  %v436 = vxor.u32 %v432, 2147483648
  %v437 = vmul.f32 %v436, 1.442695
  %v438 = vpow.pop %v437
  %v439 = vadd.f32 %v438, 1.0
  %v440 = vrcp.pop %v439
  %v441 = vmul.f32 1.0, %v440
  %v442 = vxor.u32 %v433, 2147483648
  %v443 = vmul.f32 %v442, 1.442695
  %v444 = vpow.pop %v443
  %v445 = vadd.f32 %v444, 1.0
  %v446 = vrcp.pop %v445
  %v447 = vmul.f32 1.0, %v446
  %v448 = vtanh.pop %v434
  %v449 = vxor.u32 %v435, 2147483648
  %v450 = vmul.f32 %v449, 1.442695
  %v451 = vpow.pop %v450
  %v452 = vadd.f32 %v451, 1.0
  %v453 = vrcp.pop %v452
  %v454 = vmul.f32 1.0, %v453
  %v455 = vmul.f32 %v447, %v182
  %v456 = vmul.f32 %v441, %v448
  %v457 = vadd.f32 %v455, %v456
  %v458 = vtanh.pop %v457
  %v459 = vmul.f32 %v454, %v458
  %v460 = vsel %vm173, 1, 0
  %461 = vset.pattern.permute.xlu0 0
  %462 = vperm.xlu0 %461, %v460
  %v463 = vpop.permute.xlu0 %462
  %vm464 = vcmp.eq.s32.totalorder %v463, 1
  %v465 = vsel %vm464, %v459, 0.0
  %v466 = vsel %vm464, %v459, %v181
  %v467 = vsel %vm464, %v457, %v182
  %s468 = scalar_lea.vmem %s0, 16
  %v469 = vld [vmem:[%s468] sm:$0xff]
  %v470 = vld [vmem:[%s468 + $0x8] sm:$0xff]
  %v471 = vunpack.c.l.bf16 %v469
  %v472 = vunpack.c.h.bf16 %v469
  %v473 = vunpack.c.l.bf16 %v470
  %v474 = vunpack.c.h.bf16 %v470
  %v475 = vpack.c.bf16 %v466, %v466
  %476 = vmatprep.subr.bf16.mxu0 %v315
  %477 = vmatpush1.bf16.msra.mxu0 %v314
  %478 = vmatprep.subr.bf16.mxu0 %v311
  %479 = vmatpush1.bf16.msra.mxu0 %v310
  %480 = vmatprep.subr.bf16.mxu0 %v307
  %481 = vmatpush1.bf16.msra.mxu0 %v306
  %482 = vmatprep.subr.bf16.mxu0 %v303
  %483 = vmatpush1.bf16.msra.mxu0 %v302
  %484 = vmatprep.subr.bf16.mxu0 %v299
  %485 = vmatpush1.bf16.msra.mxu0 %v298
  %486 = vmatprep.subr.bf16.mxu0 %v295
  %487 = vmatpush1.bf16.msra.mxu0 %v294
  %488 = vmatprep.subr.bf16.mxu0 %v291
  %489 = vmatpush1.bf16.msra.mxu0 %v290
  %490 = vmatprep.subr.bf16.mxu0 %v287
  %491 = vmatpush1.bf16.msra.mxu0 %v286
  %492 = vmatprep.subr.bf16.mxu0 0
  %493 = vmatpush2.bf16.msra.mxu0 0
  %494 = vmatprep.subr.bf16.mxu0 0
  %495 = vmatpush2.bf16.msra.mxu0 0
  %496 = vmatprep.subr.bf16.mxu0 0
  %497 = vmatpush2.bf16.msra.mxu0 0
  %498 = vmatprep.subr.bf16.mxu0 0
  %499 = vmatpush2.bf16.msra.mxu0 0
  %500 = vmatprep.subr.bf16.mxu0 0
  %501 = vmatpush2.bf16.msra.mxu0 0
  %502 = vmatprep.subr.bf16.mxu0 0
  %503 = vmatpush2.bf16.msra.mxu0 0
  %504 = vmatprep.subr.bf16.mxu0 0
  %505 = vmatpush2.bf16.msra.mxu0 0
  %506 = vmatprep.subr.bf16.mxu0 0
  %507 = vmatpush2.bf16.msra.mxu0 0
  %508 = vmatprep.mubr.bf16.mxu0 0
  %509 = vmatmul.mubr.bf16.gmra.mxu0 %v475
  %v510 = vpop.f32.mrf.mxu0
  %v511 = vadd.f32 0.0, %v510
  %v512 = vpop.f32.mrf.mxu0
  %v513 = vadd.f32 0.0, %v512
  %v514 = vpop.f32.mrf.mxu0
  %v515 = vpop.f32.mrf.mxu0
  %516 = vdwg.mxu0
  %517 = vmatprep.subr.bf16.mxu0 %v317
  %518 = vmatpush1.bf16.msra.mxu0 %v316
  %519 = vmatprep.subr.bf16.mxu0 %v313
  %520 = vmatpush1.bf16.msra.mxu0 %v312
  %521 = vmatprep.subr.bf16.mxu0 %v309
  %522 = vmatpush1.bf16.msra.mxu0 %v308
  %523 = vmatprep.subr.bf16.mxu0 %v305
  %524 = vmatpush1.bf16.msra.mxu0 %v304
  %525 = vmatprep.subr.bf16.mxu0 %v301
  %526 = vmatpush1.bf16.msra.mxu0 %v300
  %527 = vmatprep.subr.bf16.mxu0 %v297
  %528 = vmatpush1.bf16.msra.mxu0 %v296
  %529 = vmatprep.subr.bf16.mxu0 %v293
  %530 = vmatpush1.bf16.msra.mxu0 %v292
  %531 = vmatprep.subr.bf16.mxu0 %v289
  %532 = vmatpush1.bf16.msra.mxu0 %v288
  %533 = vmatprep.subr.bf16.mxu0 0
  %534 = vmatpush2.bf16.msra.mxu0 0
  %535 = vmatprep.subr.bf16.mxu0 0
  %536 = vmatpush2.bf16.msra.mxu0 0
  %537 = vmatprep.subr.bf16.mxu0 0
  %538 = vmatpush2.bf16.msra.mxu0 0
  %539 = vmatprep.subr.bf16.mxu0 0
  %540 = vmatpush2.bf16.msra.mxu0 0
  %541 = vmatprep.subr.bf16.mxu0 0
  %542 = vmatpush2.bf16.msra.mxu0 0
  %543 = vmatprep.subr.bf16.mxu0 0
  %544 = vmatpush2.bf16.msra.mxu0 0
  %545 = vmatprep.subr.bf16.mxu0 0
  %546 = vmatpush2.bf16.msra.mxu0 0
  %547 = vmatprep.subr.bf16.mxu0 0
  %548 = vmatpush2.bf16.msra.mxu0 0
  %549 = vmatprep.mubr.bf16.mxu0 0
  %550 = vmatmul.mubr.bf16.gmra.mxu0 %v475
  %v551 = vpop.f32.mrf.mxu0
  %v552 = vadd.f32 0.0, %v551
  %v553 = vpop.f32.mrf.mxu0
  %v554 = vadd.f32 0.0, %v553
  %v555 = vpop.f32.mrf.mxu0
  %v556 = vpop.f32.mrf.mxu0
  %557 = vdwg.mxu0
  %v558 = vadd.f32 %v471, %v511
  %v559 = vadd.f32 %v472, %v513
  %v560 = vadd.f32 %v473, %v552
  %v561 = vadd.f32 %v474, %v554
  %v562 = vxor.u32 %v558, 2147483648
  %v563 = vmul.f32 %v562, 1.442695
  %v564 = vpow.pop %v563
  %v565 = vadd.f32 %v564, 1.0
  %v566 = vrcp.pop %v565
  %v567 = vmul.f32 1.0, %v566
  %v568 = vxor.u32 %v559, 2147483648
  %v569 = vmul.f32 %v568, 1.442695
  %v570 = vpow.pop %v569
  %v571 = vadd.f32 %v570, 1.0
  %v572 = vrcp.pop %v571
  %v573 = vmul.f32 1.0, %v572
  %v574 = vtanh.pop %v560
  %v575 = vxor.u32 %v561, 2147483648
  %v576 = vmul.f32 %v575, 1.442695
  %v577 = vpow.pop %v576
  %v578 = vadd.f32 %v577, 1.0
  %v579 = vrcp.pop %v578
  %v580 = vmul.f32 1.0, %v579
  %v581 = vmul.f32 %v573, %v467
  %v582 = vmul.f32 %v567, %v574
  %v583 = vadd.f32 %v581, %v582
  %v584 = vtanh.pop %v583
  %v585 = vmul.f32 %v580, %v584
  %v586 = vsel %vm174, 1, 0
  %587 = vset.pattern.permute.xlu0 0
  %588 = vperm.xlu0 %587, %v586
  %v589 = vpop.permute.xlu0 %588
  %vm590 = vcmp.eq.s32.totalorder %v589, 1
  %v591 = vsel %vm590, %v585, 0.0
  %v592 = vsel %vm590, %v585, %v466
  %v593 = vsel %vm590, %v583, %v467
  %s594 = scalar_lea.vmem %s0, 32
  %v595 = vld [vmem:[%s594] sm:$0xff]
  %v596 = vld [vmem:[%s594 + $0x8] sm:$0xff]
  %v597 = vunpack.c.l.bf16 %v595
  %v598 = vunpack.c.h.bf16 %v595
  %v599 = vunpack.c.l.bf16 %v596
  %v600 = vunpack.c.h.bf16 %v596
  %v601 = vpack.c.bf16 %v592, %v592
  %602 = vmatprep.subr.bf16.mxu0 %v315
  %603 = vmatpush1.bf16.msra.mxu0 %v314
  %604 = vmatprep.subr.bf16.mxu0 %v311
  %605 = vmatpush1.bf16.msra.mxu0 %v310
  %606 = vmatprep.subr.bf16.mxu0 %v307
  %607 = vmatpush1.bf16.msra.mxu0 %v306
  %608 = vmatprep.subr.bf16.mxu0 %v303
  %609 = vmatpush1.bf16.msra.mxu0 %v302
  %610 = vmatprep.subr.bf16.mxu0 %v299
  %611 = vmatpush1.bf16.msra.mxu0 %v298
  %612 = vmatprep.subr.bf16.mxu0 %v295
  %613 = vmatpush1.bf16.msra.mxu0 %v294
  %614 = vmatprep.subr.bf16.mxu0 %v291
  %615 = vmatpush1.bf16.msra.mxu0 %v290
  %616 = vmatprep.subr.bf16.mxu0 %v287
  %617 = vmatpush1.bf16.msra.mxu0 %v286
  %618 = vmatprep.subr.bf16.mxu0 0
  %619 = vmatpush2.bf16.msra.mxu0 0
  %620 = vmatprep.subr.bf16.mxu0 0
  %621 = vmatpush2.bf16.msra.mxu0 0
  %622 = vmatprep.subr.bf16.mxu0 0
  %623 = vmatpush2.bf16.msra.mxu0 0
  %624 = vmatprep.subr.bf16.mxu0 0
  %625 = vmatpush2.bf16.msra.mxu0 0
  %626 = vmatprep.subr.bf16.mxu0 0
  %627 = vmatpush2.bf16.msra.mxu0 0
  %628 = vmatprep.subr.bf16.mxu0 0
  %629 = vmatpush2.bf16.msra.mxu0 0
  %630 = vmatprep.subr.bf16.mxu0 0
  %631 = vmatpush2.bf16.msra.mxu0 0
  %632 = vmatprep.subr.bf16.mxu0 0
  %633 = vmatpush2.bf16.msra.mxu0 0
  %634 = vmatprep.mubr.bf16.mxu0 0
  %635 = vmatmul.mubr.bf16.gmra.mxu0 %v601
  %v636 = vpop.f32.mrf.mxu0
  %v637 = vadd.f32 0.0, %v636
  %v638 = vpop.f32.mrf.mxu0
  %v639 = vadd.f32 0.0, %v638
  %v640 = vpop.f32.mrf.mxu0
  %v641 = vpop.f32.mrf.mxu0
  %642 = vdwg.mxu0
  %643 = vmatprep.subr.bf16.mxu0 %v317
  %644 = vmatpush1.bf16.msra.mxu0 %v316
  %645 = vmatprep.subr.bf16.mxu0 %v313
  %646 = vmatpush1.bf16.msra.mxu0 %v312
  %647 = vmatprep.subr.bf16.mxu0 %v309
  %648 = vmatpush1.bf16.msra.mxu0 %v308
  %649 = vmatprep.subr.bf16.mxu0 %v305
  %650 = vmatpush1.bf16.msra.mxu0 %v304
  %651 = vmatprep.subr.bf16.mxu0 %v301
  %652 = vmatpush1.bf16.msra.mxu0 %v300
  %653 = vmatprep.subr.bf16.mxu0 %v297
  %654 = vmatpush1.bf16.msra.mxu0 %v296
  %655 = vmatprep.subr.bf16.mxu0 %v293
  %656 = vmatpush1.bf16.msra.mxu0 %v292
  %657 = vmatprep.subr.bf16.mxu0 %v289
  %658 = vmatpush1.bf16.msra.mxu0 %v288
  %659 = vmatprep.subr.bf16.mxu0 0
  %660 = vmatpush2.bf16.msra.mxu0 0
  %661 = vmatprep.subr.bf16.mxu0 0
  %662 = vmatpush2.bf16.msra.mxu0 0
  %663 = vmatprep.subr.bf16.mxu0 0
  %664 = vmatpush2.bf16.msra.mxu0 0
  %665 = vmatprep.subr.bf16.mxu0 0
  %666 = vmatpush2.bf16.msra.mxu0 0
  %667 = vmatprep.subr.bf16.mxu0 0
  %668 = vmatpush2.bf16.msra.mxu0 0
  %669 = vmatprep.subr.bf16.mxu0 0
  %670 = vmatpush2.bf16.msra.mxu0 0
  %671 = vmatprep.subr.bf16.mxu0 0
  %672 = vmatpush2.bf16.msra.mxu0 0
  %673 = vmatprep.subr.bf16.mxu0 0
  %674 = vmatpush2.bf16.msra.mxu0 0
  %675 = vmatprep.mubr.bf16.mxu0 0
  %676 = vmatmul.mubr.bf16.gmra.mxu0 %v601
  %v677 = vpop.f32.mrf.mxu0
  %v678 = vadd.f32 0.0, %v677
  %v679 = vpop.f32.mrf.mxu0
  %v680 = vadd.f32 0.0, %v679
  %v681 = vpop.f32.mrf.mxu0
  %v682 = vpop.f32.mrf.mxu0
  %683 = vdwg.mxu0
  %v684 = vadd.f32 %v597, %v637
  %v685 = vadd.f32 %v598, %v639
  %v686 = vadd.f32 %v599, %v678
  %v687 = vadd.f32 %v600, %v680
  %v688 = vxor.u32 %v684, 2147483648
  %v689 = vmul.f32 %v688, 1.442695
  %v690 = vpow.pop %v689
  %v691 = vadd.f32 %v690, 1.0
  %v692 = vrcp.pop %v691
  %v693 = vmul.f32 1.0, %v692
  %v694 = vxor.u32 %v685, 2147483648
  %v695 = vmul.f32 %v694, 1.442695
  %v696 = vpow.pop %v695
  %v697 = vadd.f32 %v696, 1.0
  %v698 = vrcp.pop %v697
  %v699 = vmul.f32 1.0, %v698
  %v700 = vtanh.pop %v686
  %v701 = vxor.u32 %v687, 2147483648
  %v702 = vmul.f32 %v701, 1.442695
  %v703 = vpow.pop %v702
  %v704 = vadd.f32 %v703, 1.0
  %v705 = vrcp.pop %v704
  %v706 = vmul.f32 1.0, %v705
  %v707 = vmul.f32 %v699, %v593
  %v708 = vmul.f32 %v693, %v700
  %v709 = vadd.f32 %v707, %v708
  %v710 = vtanh.pop %v709
  %v711 = vmul.f32 %v706, %v710
  %v712 = vsel %vm175, 1, 0
  %713 = vset.pattern.permute.xlu0 0
  %714 = vperm.xlu0 %713, %v712
  %v715 = vpop.permute.xlu0 %714
  %vm716 = vcmp.eq.s32.totalorder %v715, 1
  %v717 = vsel %vm716, %v711, 0.0
  %v718 = vsel %vm716, %v711, %v592
  %v719 = vsel %vm716, %v709, %v593
  %s720 = scalar_lea.vmem %s0, 48
  %v721 = vld [vmem:[%s720] sm:$0xff]
  %v722 = vld [vmem:[%s720 + $0x8] sm:$0xff]
  %v723 = vunpack.c.l.bf16 %v721
  %v724 = vunpack.c.h.bf16 %v721
  %v725 = vunpack.c.l.bf16 %v722
  %v726 = vunpack.c.h.bf16 %v722
  %v727 = vpack.c.bf16 %v718, %v718
  %728 = vmatprep.subr.bf16.mxu0 %v315
  %729 = vmatpush1.bf16.msra.mxu0 %v314
  %730 = vmatprep.subr.bf16.mxu0 %v311
  %731 = vmatpush1.bf16.msra.mxu0 %v310
  %732 = vmatprep.subr.bf16.mxu0 %v307
  %733 = vmatpush1.bf16.msra.mxu0 %v306
  %734 = vmatprep.subr.bf16.mxu0 %v303
  %735 = vmatpush1.bf16.msra.mxu0 %v302
  %736 = vmatprep.subr.bf16.mxu0 %v299
  %737 = vmatpush1.bf16.msra.mxu0 %v298
  %738 = vmatprep.subr.bf16.mxu0 %v295
  %739 = vmatpush1.bf16.msra.mxu0 %v294
  %740 = vmatprep.subr.bf16.mxu0 %v291
  %741 = vmatpush1.bf16.msra.mxu0 %v290
  %742 = vmatprep.subr.bf16.mxu0 %v287
  %743 = vmatpush1.bf16.msra.mxu0 %v286
  %744 = vmatprep.subr.bf16.mxu0 0
  %745 = vmatpush2.bf16.msra.mxu0 0
  %746 = vmatprep.subr.bf16.mxu0 0
  %747 = vmatpush2.bf16.msra.mxu0 0
  %748 = vmatprep.subr.bf16.mxu0 0
  %749 = vmatpush2.bf16.msra.mxu0 0
  %750 = vmatprep.subr.bf16.mxu0 0
  %751 = vmatpush2.bf16.msra.mxu0 0
  %752 = vmatprep.subr.bf16.mxu0 0
  %753 = vmatpush2.bf16.msra.mxu0 0
  %754 = vmatprep.subr.bf16.mxu0 0
  %755 = vmatpush2.bf16.msra.mxu0 0
  %756 = vmatprep.subr.bf16.mxu0 0
  %757 = vmatpush2.bf16.msra.mxu0 0
  %758 = vmatprep.subr.bf16.mxu0 0
  %759 = vmatpush2.bf16.msra.mxu0 0
  %760 = vmatprep.mubr.bf16.mxu0 0
  %761 = vmatmul.mubr.bf16.gmra.mxu0 %v727
  %v762 = vpop.f32.mrf.mxu0
  %v763 = vadd.f32 0.0, %v762
  %v764 = vpop.f32.mrf.mxu0
  %v765 = vadd.f32 0.0, %v764
  %v766 = vpop.f32.mrf.mxu0
  %v767 = vpop.f32.mrf.mxu0
  %768 = vdwg.mxu0
  %769 = vmatprep.subr.bf16.mxu0 %v317
  %770 = vmatpush1.bf16.msra.mxu0 %v316
  %771 = vmatprep.subr.bf16.mxu0 %v313
  %772 = vmatpush1.bf16.msra.mxu0 %v312
  %773 = vmatprep.subr.bf16.mxu0 %v309
  %774 = vmatpush1.bf16.msra.mxu0 %v308
  %775 = vmatprep.subr.bf16.mxu0 %v305
  %776 = vmatpush1.bf16.msra.mxu0 %v304
  %777 = vmatprep.subr.bf16.mxu0 %v301
  %778 = vmatpush1.bf16.msra.mxu0 %v300
  %779 = vmatprep.subr.bf16.mxu0 %v297
  %780 = vmatpush1.bf16.msra.mxu0 %v296
  %781 = vmatprep.subr.bf16.mxu0 %v293
  %782 = vmatpush1.bf16.msra.mxu0 %v292
  %783 = vmatprep.subr.bf16.mxu0 %v289
  %784 = vmatpush1.bf16.msra.mxu0 %v288
  %785 = vmatprep.subr.bf16.mxu0 0
  %786 = vmatpush2.bf16.msra.mxu0 0
  %787 = vmatprep.subr.bf16.mxu0 0
  %788 = vmatpush2.bf16.msra.mxu0 0
  %789 = vmatprep.subr.bf16.mxu0 0
  %790 = vmatpush2.bf16.msra.mxu0 0
  %791 = vmatprep.subr.bf16.mxu0 0
  %792 = vmatpush2.bf16.msra.mxu0 0
  %793 = vmatprep.subr.bf16.mxu0 0
  %794 = vmatpush2.bf16.msra.mxu0 0
  %795 = vmatprep.subr.bf16.mxu0 0
  %796 = vmatpush2.bf16.msra.mxu0 0
  %797 = vmatprep.subr.bf16.mxu0 0
  %798 = vmatpush2.bf16.msra.mxu0 0
  %799 = vmatprep.subr.bf16.mxu0 0
  %800 = vmatpush2.bf16.msra.mxu0 0
  %801 = vmatprep.mubr.bf16.mxu0 0
  %802 = vmatmul.mubr.bf16.gmra.mxu0 %v727
  %v803 = vpop.f32.mrf.mxu0
  %v804 = vadd.f32 0.0, %v803
  %v805 = vpop.f32.mrf.mxu0
  %v806 = vadd.f32 0.0, %v805
  %v807 = vpop.f32.mrf.mxu0
  %v808 = vpop.f32.mrf.mxu0
  %809 = vdwg.mxu0
  %v810 = vadd.f32 %v723, %v763
  %v811 = vadd.f32 %v724, %v765
  %v812 = vadd.f32 %v725, %v804
  %v813 = vadd.f32 %v726, %v806
  %v814 = vxor.u32 %v810, 2147483648
  %v815 = vmul.f32 %v814, 1.442695
  %v816 = vpow.pop %v815
  %v817 = vadd.f32 %v816, 1.0
  %v818 = vrcp.pop %v817
  %v819 = vmul.f32 1.0, %v818
  %v820 = vxor.u32 %v811, 2147483648
  %v821 = vmul.f32 %v820, 1.442695
  %v822 = vpow.pop %v821
  %v823 = vadd.f32 %v822, 1.0
  %v824 = vrcp.pop %v823
  %v825 = vmul.f32 1.0, %v824
  %v826 = vtanh.pop %v812
  %v827 = vxor.u32 %v813, 2147483648
  %v828 = vmul.f32 %v827, 1.442695
  %v829 = vpow.pop %v828
  %v830 = vadd.f32 %v829, 1.0
  %v831 = vrcp.pop %v830
  %v832 = vmul.f32 1.0, %v831
  %v833 = vmul.f32 %v825, %v719
  %v834 = vmul.f32 %v819, %v826
  %v835 = vadd.f32 %v833, %v834
  %v836 = vtanh.pop %v835
  %v837 = vmul.f32 %v832, %v836
  %v838 = vsel %vm176, 1, 0
  %839 = vset.pattern.permute.xlu0 0
  %840 = vperm.xlu0 %839, %v838
  %v841 = vpop.permute.xlu0 %840
  %vm842 = vcmp.eq.s32.totalorder %v841, 1
  %v843 = vsel %vm842, %v837, 0.0
  %v844 = vsel %vm842, %v837, %v718
  %v845 = vsel %vm842, %v835, %v719
  %s846 = scalar_lea.vmem %s0, 64
  %v847 = vld [vmem:[%s846] sm:$0xff]
  %v848 = vld [vmem:[%s846 + $0x8] sm:$0xff]
  %v849 = vunpack.c.l.bf16 %v847
  %v850 = vunpack.c.h.bf16 %v847
  %v851 = vunpack.c.l.bf16 %v848
  %v852 = vunpack.c.h.bf16 %v848
  %v853 = vpack.c.bf16 %v844, %v844
  %854 = vmatprep.subr.bf16.mxu0 %v315
  %855 = vmatpush1.bf16.msra.mxu0 %v314
  %856 = vmatprep.subr.bf16.mxu0 %v311
  %857 = vmatpush1.bf16.msra.mxu0 %v310
  %858 = vmatprep.subr.bf16.mxu0 %v307
  %859 = vmatpush1.bf16.msra.mxu0 %v306
  %860 = vmatprep.subr.bf16.mxu0 %v303
  %861 = vmatpush1.bf16.msra.mxu0 %v302
  %862 = vmatprep.subr.bf16.mxu0 %v299
  %863 = vmatpush1.bf16.msra.mxu0 %v298
  %864 = vmatprep.subr.bf16.mxu0 %v295
  %865 = vmatpush1.bf16.msra.mxu0 %v294
  %866 = vmatprep.subr.bf16.mxu0 %v291
  %867 = vmatpush1.bf16.msra.mxu0 %v290
  %868 = vmatprep.subr.bf16.mxu0 %v287
  %869 = vmatpush1.bf16.msra.mxu0 %v286
  %870 = vmatprep.subr.bf16.mxu0 0
  %871 = vmatpush2.bf16.msra.mxu0 0
  %872 = vmatprep.subr.bf16.mxu0 0
  %873 = vmatpush2.bf16.msra.mxu0 0
  %874 = vmatprep.subr.bf16.mxu0 0
  %875 = vmatpush2.bf16.msra.mxu0 0
  %876 = vmatprep.subr.bf16.mxu0 0
  %877 = vmatpush2.bf16.msra.mxu0 0
  %878 = vmatprep.subr.bf16.mxu0 0
  %879 = vmatpush2.bf16.msra.mxu0 0
  %880 = vmatprep.subr.bf16.mxu0 0
  %881 = vmatpush2.bf16.msra.mxu0 0
  %882 = vmatprep.subr.bf16.mxu0 0
  %883 = vmatpush2.bf16.msra.mxu0 0
  %884 = vmatprep.subr.bf16.mxu0 0
  %885 = vmatpush2.bf16.msra.mxu0 0
  %886 = vmatprep.mubr.bf16.mxu0 0
  %887 = vmatmul.mubr.bf16.gmra.mxu0 %v853
  %v888 = vpop.f32.mrf.mxu0
  %v889 = vadd.f32 0.0, %v888
  %v890 = vpop.f32.mrf.mxu0
  %v891 = vadd.f32 0.0, %v890
  %v892 = vpop.f32.mrf.mxu0
  %v893 = vpop.f32.mrf.mxu0
  %894 = vdwg.mxu0
  %895 = vmatprep.subr.bf16.mxu0 %v317
  %896 = vmatpush1.bf16.msra.mxu0 %v316
  %897 = vmatprep.subr.bf16.mxu0 %v313
  %898 = vmatpush1.bf16.msra.mxu0 %v312
  %899 = vmatprep.subr.bf16.mxu0 %v309
  %900 = vmatpush1.bf16.msra.mxu0 %v308
  %901 = vmatprep.subr.bf16.mxu0 %v305
  %902 = vmatpush1.bf16.msra.mxu0 %v304
  %903 = vmatprep.subr.bf16.mxu0 %v301
  %904 = vmatpush1.bf16.msra.mxu0 %v300
  %905 = vmatprep.subr.bf16.mxu0 %v297
  %906 = vmatpush1.bf16.msra.mxu0 %v296
  %907 = vmatprep.subr.bf16.mxu0 %v293
  %908 = vmatpush1.bf16.msra.mxu0 %v292
  %909 = vmatprep.subr.bf16.mxu0 %v289
  %910 = vmatpush1.bf16.msra.mxu0 %v288
  %911 = vmatprep.subr.bf16.mxu0 0
  %912 = vmatpush2.bf16.msra.mxu0 0
  %913 = vmatprep.subr.bf16.mxu0 0
  %914 = vmatpush2.bf16.msra.mxu0 0
  %915 = vmatprep.subr.bf16.mxu0 0
  %916 = vmatpush2.bf16.msra.mxu0 0
  %917 = vmatprep.subr.bf16.mxu0 0
  %918 = vmatpush2.bf16.msra.mxu0 0
  %919 = vmatprep.subr.bf16.mxu0 0
  %920 = vmatpush2.bf16.msra.mxu0 0
  %921 = vmatprep.subr.bf16.mxu0 0
  %922 = vmatpush2.bf16.msra.mxu0 0
  %923 = vmatprep.subr.bf16.mxu0 0
  %924 = vmatpush2.bf16.msra.mxu0 0
  %925 = vmatprep.subr.bf16.mxu0 0
  %926 = vmatpush2.bf16.msra.mxu0 0
  %927 = vmatprep.mubr.bf16.mxu0 0
  %928 = vmatmul.mubr.bf16.gmra.mxu0 %v853
  %v929 = vpop.f32.mrf.mxu0
  %v930 = vadd.f32 0.0, %v929
  %v931 = vpop.f32.mrf.mxu0
  %v932 = vadd.f32 0.0, %v931
  %v933 = vpop.f32.mrf.mxu0
  %v934 = vpop.f32.mrf.mxu0
  %935 = vdwg.mxu0
  %v936 = vadd.f32 %v849, %v889
  %v937 = vadd.f32 %v850, %v891
  %v938 = vadd.f32 %v851, %v930
  %v939 = vadd.f32 %v852, %v932
  %v940 = vxor.u32 %v936, 2147483648
  %v941 = vmul.f32 %v940, 1.442695
  %v942 = vpow.pop %v941
  %v943 = vadd.f32 %v942, 1.0
  %v944 = vrcp.pop %v943
  %v945 = vmul.f32 1.0, %v944
  %v946 = vxor.u32 %v937, 2147483648
  %v947 = vmul.f32 %v946, 1.442695
  %v948 = vpow.pop %v947
  %v949 = vadd.f32 %v948, 1.0
  %v950 = vrcp.pop %v949
  %v951 = vmul.f32 1.0, %v950
  %v952 = vtanh.pop %v938
  %v953 = vxor.u32 %v939, 2147483648
  %v954 = vmul.f32 %v953, 1.442695
  %v955 = vpow.pop %v954
  %v956 = vadd.f32 %v955, 1.0
  %v957 = vrcp.pop %v956
  %v958 = vmul.f32 1.0, %v957
  %v959 = vmul.f32 %v951, %v845
  %v960 = vmul.f32 %v945, %v952
  %v961 = vadd.f32 %v959, %v960
  %v962 = vtanh.pop %v961
  %v963 = vmul.f32 %v958, %v962
  %v964 = vsel %vm177, 1, 0
  %965 = vset.pattern.permute.xlu0 0
  %966 = vperm.xlu0 %965, %v964
  %v967 = vpop.permute.xlu0 %966
  %vm968 = vcmp.eq.s32.totalorder %v967, 1
  %v969 = vsel %vm968, %v963, 0.0
  %v970 = vsel %vm968, %v963, %v844
  %v971 = vsel %vm968, %v961, %v845
  %s972 = scalar_lea.vmem %s0, 80
  %v973 = vld [vmem:[%s972] sm:$0xff]
  %v974 = vld [vmem:[%s972 + $0x8] sm:$0xff]
  %v975 = vunpack.c.l.bf16 %v973
  %v976 = vunpack.c.h.bf16 %v973
  %v977 = vunpack.c.l.bf16 %v974
  %v978 = vunpack.c.h.bf16 %v974
  %v979 = vpack.c.bf16 %v970, %v970
  %980 = vmatprep.subr.bf16.mxu0 %v315
  %981 = vmatpush1.bf16.msra.mxu0 %v314
  %982 = vmatprep.subr.bf16.mxu0 %v311
  %983 = vmatpush1.bf16.msra.mxu0 %v310
  %984 = vmatprep.subr.bf16.mxu0 %v307
  %985 = vmatpush1.bf16.msra.mxu0 %v306
  %986 = vmatprep.subr.bf16.mxu0 %v303
  %987 = vmatpush1.bf16.msra.mxu0 %v302
  %988 = vmatprep.subr.bf16.mxu0 %v299
  %989 = vmatpush1.bf16.msra.mxu0 %v298
  %990 = vmatprep.subr.bf16.mxu0 %v295
  %991 = vmatpush1.bf16.msra.mxu0 %v294
  %992 = vmatprep.subr.bf16.mxu0 %v291
  %993 = vmatpush1.bf16.msra.mxu0 %v290
  %994 = vmatprep.subr.bf16.mxu0 %v287
  %995 = vmatpush1.bf16.msra.mxu0 %v286
  %996 = vmatprep.subr.bf16.mxu0 0
  %997 = vmatpush2.bf16.msra.mxu0 0
  %998 = vmatprep.subr.bf16.mxu0 0
  %999 = vmatpush2.bf16.msra.mxu0 0
  %1000 = vmatprep.subr.bf16.mxu0 0
  %1001 = vmatpush2.bf16.msra.mxu0 0
  %1002 = vmatprep.subr.bf16.mxu0 0
  %1003 = vmatpush2.bf16.msra.mxu0 0
  %1004 = vmatprep.subr.bf16.mxu0 0
  %1005 = vmatpush2.bf16.msra.mxu0 0
  %1006 = vmatprep.subr.bf16.mxu0 0
  %1007 = vmatpush2.bf16.msra.mxu0 0
  %1008 = vmatprep.subr.bf16.mxu0 0
  %1009 = vmatpush2.bf16.msra.mxu0 0
  %1010 = vmatprep.subr.bf16.mxu0 0
  %1011 = vmatpush2.bf16.msra.mxu0 0
  %1012 = vmatprep.mubr.bf16.mxu0 0
  %1013 = vmatmul.mubr.bf16.gmra.mxu0 %v979
  %v1014 = vpop.f32.mrf.mxu0
  %v1015 = vadd.f32 0.0, %v1014
  %v1016 = vpop.f32.mrf.mxu0
  %v1017 = vadd.f32 0.0, %v1016
  %v1018 = vpop.f32.mrf.mxu0
  %v1019 = vpop.f32.mrf.mxu0
  %1020 = vdwg.mxu0
  %1021 = vmatprep.subr.bf16.mxu0 %v317
  %1022 = vmatpush1.bf16.msra.mxu0 %v316
  %1023 = vmatprep.subr.bf16.mxu0 %v313
  %1024 = vmatpush1.bf16.msra.mxu0 %v312
  %1025 = vmatprep.subr.bf16.mxu0 %v309
  %1026 = vmatpush1.bf16.msra.mxu0 %v308
  %1027 = vmatprep.subr.bf16.mxu0 %v305
  %1028 = vmatpush1.bf16.msra.mxu0 %v304
  %1029 = vmatprep.subr.bf16.mxu0 %v301
  %1030 = vmatpush1.bf16.msra.mxu0 %v300
  %1031 = vmatprep.subr.bf16.mxu0 %v297
  %1032 = vmatpush1.bf16.msra.mxu0 %v296
  %1033 = vmatprep.subr.bf16.mxu0 %v293
  %1034 = vmatpush1.bf16.msra.mxu0 %v292
  %1035 = vmatprep.subr.bf16.mxu0 %v289
  %1036 = vmatpush1.bf16.msra.mxu0 %v288
  %1037 = vmatprep.subr.bf16.mxu0 0
  %1038 = vmatpush2.bf16.msra.mxu0 0
  %1039 = vmatprep.subr.bf16.mxu0 0
  %1040 = vmatpush2.bf16.msra.mxu0 0
  %1041 = vmatprep.subr.bf16.mxu0 0
  %1042 = vmatpush2.bf16.msra.mxu0 0
  %1043 = vmatprep.subr.bf16.mxu0 0
  %1044 = vmatpush2.bf16.msra.mxu0 0
  %1045 = vmatprep.subr.bf16.mxu0 0
  %1046 = vmatpush2.bf16.msra.mxu0 0
  %1047 = vmatprep.subr.bf16.mxu0 0
  %1048 = vmatpush2.bf16.msra.mxu0 0
  %1049 = vmatprep.subr.bf16.mxu0 0
  %1050 = vmatpush2.bf16.msra.mxu0 0
  %1051 = vmatprep.subr.bf16.mxu0 0
  %1052 = vmatpush2.bf16.msra.mxu0 0
  %1053 = vmatprep.mubr.bf16.mxu0 0
  %1054 = vmatmul.mubr.bf16.gmra.mxu0 %v979
  %v1055 = vpop.f32.mrf.mxu0
  %v1056 = vadd.f32 0.0, %v1055
  %v1057 = vpop.f32.mrf.mxu0
  %v1058 = vadd.f32 0.0, %v1057
  %v1059 = vpop.f32.mrf.mxu0
  %v1060 = vpop.f32.mrf.mxu0
  %1061 = vdwg.mxu0
  %v1062 = vadd.f32 %v975, %v1015
  %v1063 = vadd.f32 %v976, %v1017
  %v1064 = vadd.f32 %v977, %v1056
  %v1065 = vadd.f32 %v978, %v1058
  %v1066 = vxor.u32 %v1062, 2147483648
  %v1067 = vmul.f32 %v1066, 1.442695
  %v1068 = vpow.pop %v1067
  %v1069 = vadd.f32 %v1068, 1.0
  %v1070 = vrcp.pop %v1069
  %v1071 = vmul.f32 1.0, %v1070
  %v1072 = vxor.u32 %v1063, 2147483648
  %v1073 = vmul.f32 %v1072, 1.442695
  %v1074 = vpow.pop %v1073
  %v1075 = vadd.f32 %v1074, 1.0
  %v1076 = vrcp.pop %v1075
  %v1077 = vmul.f32 1.0, %v1076
  %v1078 = vtanh.pop %v1064
  %v1079 = vxor.u32 %v1065, 2147483648
  %v1080 = vmul.f32 %v1079, 1.442695
  %v1081 = vpow.pop %v1080
  %v1082 = vadd.f32 %v1081, 1.0
  %v1083 = vrcp.pop %v1082
  %v1084 = vmul.f32 1.0, %v1083
  %v1085 = vmul.f32 %v1077, %v971
  %v1086 = vmul.f32 %v1071, %v1078
  %v1087 = vadd.f32 %v1085, %v1086
  %v1088 = vtanh.pop %v1087
  %v1089 = vmul.f32 %v1084, %v1088
  %v1090 = vsel %vm178, 1, 0
  %1091 = vset.pattern.permute.xlu0 0
  %1092 = vperm.xlu0 %1091, %v1090
  %v1093 = vpop.permute.xlu0 %1092
  %vm1094 = vcmp.eq.s32.totalorder %v1093, 1
  %v1095 = vsel %vm1094, %v1089, 0.0
  %v1096 = vsel %vm1094, %v1089, %v970
  %v1097 = vsel %vm1094, %v1087, %v971
  %s1098 = scalar_lea.vmem %s0, 96
  %v1099 = vld [vmem:[%s1098] sm:$0xff]
  %v1100 = vld [vmem:[%s1098 + $0x8] sm:$0xff]
  %v1101 = vunpack.c.l.bf16 %v1099
  %v1102 = vunpack.c.h.bf16 %v1099
  %v1103 = vunpack.c.l.bf16 %v1100
  %v1104 = vunpack.c.h.bf16 %v1100
  %v1105 = vpack.c.bf16 %v1096, %v1096
  %1106 = vmatprep.subr.bf16.mxu0 %v315
  %1107 = vmatpush1.bf16.msra.mxu0 %v314
  %1108 = vmatprep.subr.bf16.mxu0 %v311
  %1109 = vmatpush1.bf16.msra.mxu0 %v310
  %1110 = vmatprep.subr.bf16.mxu0 %v307
  %1111 = vmatpush1.bf16.msra.mxu0 %v306
  %1112 = vmatprep.subr.bf16.mxu0 %v303
  %1113 = vmatpush1.bf16.msra.mxu0 %v302
  %1114 = vmatprep.subr.bf16.mxu0 %v299
  %1115 = vmatpush1.bf16.msra.mxu0 %v298
  %1116 = vmatprep.subr.bf16.mxu0 %v295
  %1117 = vmatpush1.bf16.msra.mxu0 %v294
  %1118 = vmatprep.subr.bf16.mxu0 %v291
  %1119 = vmatpush1.bf16.msra.mxu0 %v290
  %1120 = vmatprep.subr.bf16.mxu0 %v287
  %1121 = vmatpush1.bf16.msra.mxu0 %v286
  %1122 = vmatprep.subr.bf16.mxu0 0
  %1123 = vmatpush2.bf16.msra.mxu0 0
  %1124 = vmatprep.subr.bf16.mxu0 0
  %1125 = vmatpush2.bf16.msra.mxu0 0
  %1126 = vmatprep.subr.bf16.mxu0 0
  %1127 = vmatpush2.bf16.msra.mxu0 0
  %1128 = vmatprep.subr.bf16.mxu0 0
  %1129 = vmatpush2.bf16.msra.mxu0 0
  %1130 = vmatprep.subr.bf16.mxu0 0
  %1131 = vmatpush2.bf16.msra.mxu0 0
  %1132 = vmatprep.subr.bf16.mxu0 0
  %1133 = vmatpush2.bf16.msra.mxu0 0
  %1134 = vmatprep.subr.bf16.mxu0 0
  %1135 = vmatpush2.bf16.msra.mxu0 0
  %1136 = vmatprep.subr.bf16.mxu0 0
  %1137 = vmatpush2.bf16.msra.mxu0 0
  %1138 = vmatprep.mubr.bf16.mxu0 0
  %1139 = vmatmul.mubr.bf16.gmra.mxu0 %v1105
  %v1140 = vpop.f32.mrf.mxu0
  %v1141 = vadd.f32 0.0, %v1140
  %v1142 = vpop.f32.mrf.mxu0
  %v1143 = vadd.f32 0.0, %v1142
  %v1144 = vpop.f32.mrf.mxu0
  %v1145 = vpop.f32.mrf.mxu0
  %1146 = vdwg.mxu0
  %1147 = vmatprep.subr.bf16.mxu0 %v317
  %1148 = vmatpush1.bf16.msra.mxu0 %v316
  %1149 = vmatprep.subr.bf16.mxu0 %v313
  %1150 = vmatpush1.bf16.msra.mxu0 %v312
  %1151 = vmatprep.subr.bf16.mxu0 %v309
  %1152 = vmatpush1.bf16.msra.mxu0 %v308
  %1153 = vmatprep.subr.bf16.mxu0 %v305
  %1154 = vmatpush1.bf16.msra.mxu0 %v304
  %1155 = vmatprep.subr.bf16.mxu0 %v301
  %1156 = vmatpush1.bf16.msra.mxu0 %v300
  %1157 = vmatprep.subr.bf16.mxu0 %v297
  %1158 = vmatpush1.bf16.msra.mxu0 %v296
  %1159 = vmatprep.subr.bf16.mxu0 %v293
  %1160 = vmatpush1.bf16.msra.mxu0 %v292
  %1161 = vmatprep.subr.bf16.mxu0 %v289
  %1162 = vmatpush1.bf16.msra.mxu0 %v288
  %1163 = vmatprep.subr.bf16.mxu0 0
  %1164 = vmatpush2.bf16.msra.mxu0 0
  %1165 = vmatprep.subr.bf16.mxu0 0
  %1166 = vmatpush2.bf16.msra.mxu0 0
  %1167 = vmatprep.subr.bf16.mxu0 0
  %1168 = vmatpush2.bf16.msra.mxu0 0
  %1169 = vmatprep.subr.bf16.mxu0 0
  %1170 = vmatpush2.bf16.msra.mxu0 0
  %1171 = vmatprep.subr.bf16.mxu0 0
  %1172 = vmatpush2.bf16.msra.mxu0 0
  %1173 = vmatprep.subr.bf16.mxu0 0
  %1174 = vmatpush2.bf16.msra.mxu0 0
  %1175 = vmatprep.subr.bf16.mxu0 0
  %1176 = vmatpush2.bf16.msra.mxu0 0
  %1177 = vmatprep.subr.bf16.mxu0 0
  %1178 = vmatpush2.bf16.msra.mxu0 0
  %1179 = vmatprep.mubr.bf16.mxu0 0
  %1180 = vmatmul.mubr.bf16.gmra.mxu0 %v1105
  %v1181 = vpop.f32.mrf.mxu0
  %v1182 = vadd.f32 0.0, %v1181
  %v1183 = vpop.f32.mrf.mxu0
  %v1184 = vadd.f32 0.0, %v1183
  %v1185 = vpop.f32.mrf.mxu0
  %v1186 = vpop.f32.mrf.mxu0
  %1187 = vdwg.mxu0
  %v1188 = vadd.f32 %v1101, %v1141
  %v1189 = vadd.f32 %v1102, %v1143
  %v1190 = vadd.f32 %v1103, %v1182
  %v1191 = vadd.f32 %v1104, %v1184
  %v1192 = vxor.u32 %v1188, 2147483648
  %v1193 = vmul.f32 %v1192, 1.442695
  %v1194 = vpow.pop %v1193
  %v1195 = vadd.f32 %v1194, 1.0
  %v1196 = vrcp.pop %v1195
  %v1197 = vmul.f32 1.0, %v1196
  %v1198 = vxor.u32 %v1189, 2147483648
  %v1199 = vmul.f32 %v1198, 1.442695
  %v1200 = vpow.pop %v1199
  %v1201 = vadd.f32 %v1200, 1.0
  %v1202 = vrcp.pop %v1201
  %v1203 = vmul.f32 1.0, %v1202
  %v1204 = vtanh.pop %v1190
  %v1205 = vxor.u32 %v1191, 2147483648
  %v1206 = vmul.f32 %v1205, 1.442695
  %v1207 = vpow.pop %v1206
  %v1208 = vadd.f32 %v1207, 1.0
  %v1209 = vrcp.pop %v1208
  %v1210 = vmul.f32 1.0, %v1209
  %v1211 = vmul.f32 %v1203, %v1097
  %v1212 = vmul.f32 %v1197, %v1204
  %v1213 = vadd.f32 %v1211, %v1212
  %v1214 = vtanh.pop %v1213
  %v1215 = vmul.f32 %v1210, %v1214
  %v1216 = vsel %vm179, 1, 0
  %1217 = vset.pattern.permute.xlu0 0
  %1218 = vperm.xlu0 %1217, %v1216
  %v1219 = vpop.permute.xlu0 %1218
  %vm1220 = vcmp.eq.s32.totalorder %v1219, 1
  %v1221 = vsel %vm1220, %v1215, 0.0
  %v1222 = vsel %vm1220, %v1215, %v1096
  %v1223 = vsel %vm1220, %v1213, %v1097
  %s1224 = scalar_lea.vmem %s0, 112
  %v1225 = vld [vmem:[%s1224] sm:$0xff]
  %v1226 = vld [vmem:[%s1224 + $0x8] sm:$0xff]
  %v1227 = vunpack.c.l.bf16 %v1225
  %v1228 = vunpack.c.h.bf16 %v1225
  %v1229 = vunpack.c.l.bf16 %v1226
  %v1230 = vunpack.c.h.bf16 %v1226
  %v1231 = vpack.c.bf16 %v1222, %v1222
  %1232 = vmatprep.subr.bf16.mxu0 %v315
  %1233 = vmatpush1.bf16.msra.mxu0 %v314
  %1234 = vmatprep.subr.bf16.mxu0 %v311
  %1235 = vmatpush1.bf16.msra.mxu0 %v310
  %1236 = vmatprep.subr.bf16.mxu0 %v307
  %1237 = vmatpush1.bf16.msra.mxu0 %v306
  %1238 = vmatprep.subr.bf16.mxu0 %v303
  %1239 = vmatpush1.bf16.msra.mxu0 %v302
  %1240 = vmatprep.subr.bf16.mxu0 %v299
  %1241 = vmatpush1.bf16.msra.mxu0 %v298
  %1242 = vmatprep.subr.bf16.mxu0 %v295
  %1243 = vmatpush1.bf16.msra.mxu0 %v294
  %1244 = vmatprep.subr.bf16.mxu0 %v291
  %1245 = vmatpush1.bf16.msra.mxu0 %v290
  %1246 = vmatprep.subr.bf16.mxu0 %v287
  %1247 = vmatpush1.bf16.msra.mxu0 %v286
  %1248 = vmatprep.subr.bf16.mxu0 0
  %1249 = vmatpush2.bf16.msra.mxu0 0
  %1250 = vmatprep.subr.bf16.mxu0 0
  %1251 = vmatpush2.bf16.msra.mxu0 0
  %1252 = vmatprep.subr.bf16.mxu0 0
  %1253 = vmatpush2.bf16.msra.mxu0 0
  %1254 = vmatprep.subr.bf16.mxu0 0
  %1255 = vmatpush2.bf16.msra.mxu0 0
  %1256 = vmatprep.subr.bf16.mxu0 0
  %1257 = vmatpush2.bf16.msra.mxu0 0
  %1258 = vmatprep.subr.bf16.mxu0 0
  %1259 = vmatpush2.bf16.msra.mxu0 0
  %1260 = vmatprep.subr.bf16.mxu0 0
  %1261 = vmatpush2.bf16.msra.mxu0 0
  %1262 = vmatprep.subr.bf16.mxu0 0
  %1263 = vmatpush2.bf16.msra.mxu0 0
  %1264 = vmatprep.mubr.bf16.mxu0 0
  %1265 = vmatmul.mubr.bf16.gmra.mxu0 %v1231
  %v1266 = vpop.f32.mrf.mxu0
  %v1267 = vadd.f32 0.0, %v1266
  %v1268 = vpop.f32.mrf.mxu0
  %v1269 = vadd.f32 0.0, %v1268
  %v1270 = vpop.f32.mrf.mxu0
  %v1271 = vpop.f32.mrf.mxu0
  %1272 = vdwg.mxu0
  %1273 = vmatprep.subr.bf16.mxu0 %v317
  %1274 = vmatpush1.bf16.msra.mxu0 %v316
  %1275 = vmatprep.subr.bf16.mxu0 %v313
  %1276 = vmatpush1.bf16.msra.mxu0 %v312
  %1277 = vmatprep.subr.bf16.mxu0 %v309
  %1278 = vmatpush1.bf16.msra.mxu0 %v308
  %1279 = vmatprep.subr.bf16.mxu0 %v305
  %1280 = vmatpush1.bf16.msra.mxu0 %v304
  %1281 = vmatprep.subr.bf16.mxu0 %v301
  %1282 = vmatpush1.bf16.msra.mxu0 %v300
  %1283 = vmatprep.subr.bf16.mxu0 %v297
  %1284 = vmatpush1.bf16.msra.mxu0 %v296
  %1285 = vmatprep.subr.bf16.mxu0 %v293
  %1286 = vmatpush1.bf16.msra.mxu0 %v292
  %1287 = vmatprep.subr.bf16.mxu0 %v289
  %1288 = vmatpush1.bf16.msra.mxu0 %v288
  %1289 = vmatprep.subr.bf16.mxu0 0
  %1290 = vmatpush2.bf16.msra.mxu0 0
  %1291 = vmatprep.subr.bf16.mxu0 0
  %1292 = vmatpush2.bf16.msra.mxu0 0
  %1293 = vmatprep.subr.bf16.mxu0 0
  %1294 = vmatpush2.bf16.msra.mxu0 0
  %1295 = vmatprep.subr.bf16.mxu0 0
  %1296 = vmatpush2.bf16.msra.mxu0 0
  %1297 = vmatprep.subr.bf16.mxu0 0
  %1298 = vmatpush2.bf16.msra.mxu0 0
  %1299 = vmatprep.subr.bf16.mxu0 0
  %1300 = vmatpush2.bf16.msra.mxu0 0
  %1301 = vmatprep.subr.bf16.mxu0 0
  %1302 = vmatpush2.bf16.msra.mxu0 0
  %1303 = vmatprep.subr.bf16.mxu0 0
  %1304 = vmatpush2.bf16.msra.mxu0 0
  %1305 = vmatprep.mubr.bf16.mxu0 0
  %1306 = vmatmul.mubr.bf16.gmra.mxu0 %v1231
  %v1307 = vpop.f32.mrf.mxu0
  %v1308 = vadd.f32 0.0, %v1307
  %v1309 = vpop.f32.mrf.mxu0
  %v1310 = vadd.f32 0.0, %v1309
  %v1311 = vpop.f32.mrf.mxu0
  %v1312 = vpop.f32.mrf.mxu0
  %1313 = vdwg.mxu0
  %v1314 = vadd.f32 %v1227, %v1267
  %v1315 = vadd.f32 %v1228, %v1269
  %v1316 = vadd.f32 %v1229, %v1308
  %v1317 = vadd.f32 %v1230, %v1310
  %v1318 = vxor.u32 %v1314, 2147483648
  %v1319 = vmul.f32 %v1318, 1.442695
  %v1320 = vpow.pop %v1319
  %v1321 = vadd.f32 %v1320, 1.0
  %v1322 = vrcp.pop %v1321
  %v1323 = vmul.f32 1.0, %v1322
  %v1324 = vxor.u32 %v1315, 2147483648
  %v1325 = vmul.f32 %v1324, 1.442695
  %v1326 = vpow.pop %v1325
  %v1327 = vadd.f32 %v1326, 1.0
  %v1328 = vrcp.pop %v1327
  %v1329 = vmul.f32 1.0, %v1328
  %v1330 = vtanh.pop %v1316
  %v1331 = vxor.u32 %v1317, 2147483648
  %v1332 = vmul.f32 %v1331, 1.442695
  %v1333 = vpow.pop %v1332
  %v1334 = vadd.f32 %v1333, 1.0
  %v1335 = vrcp.pop %v1334
  %v1336 = vmul.f32 1.0, %v1335
  %v1337 = vmul.f32 %v1329, %v1223
  %v1338 = vmul.f32 %v1323, %v1330
  %v1339 = vadd.f32 %v1337, %v1338
  %v1340 = vtanh.pop %v1339
  %v1341 = vmul.f32 %v1336, %v1340
  %v1342 = vsel %vm180, 1, 0
  %1343 = vset.pattern.permute.xlu0 0
  %1344 = vperm.xlu0 %1343, %v1342
  %v1345 = vpop.permute.xlu0 %1344
  %vm1346 = vcmp.eq.s32.totalorder %v1345, 1
  %v1347 = vsel %vm1346, %v1341, 0.0
  %v1348 = vsel %vm1346, %v1341, %v1222
  %v1349 = vsel %vm1346, %v1339, %v1223
  %1350 = vst [vmem:[#allocation2] sm:$0xff] %v1348
  %1351 = vst [vmem:[#allocation3] sm:$0xff] %v1349
  %v1353 = vcombine.high %v465, %v465
  %v1355 = vunpack.c.l.s4 1966171168
  %v1356 = vunpack.c.0.s8 %v1355
  %v1357 = vlaneseq
  %v1358 = vshrl.u32 %v1357, 7
  %v1359 = vsub.s32 %v1356, %v1358
  %v1360 = vrot.slane %v465, %v1359
  %v1362 = vunpack.c.l.s4 1966171168
  %v1363 = vunpack.c.0.s8 %v1362
  %v1364 = vlaneseq
  %v1365 = vshrl.u32 %v1364, 7
  %v1366 = vsub.s32 %v1363, %v1365
  %v1367 = vrot.slane %v1353, %v1366
  %v1368 = vcombine.high %v1360, %v1360
  %v1369 = vcombine.high %v1367, %v1367
  %v1371 = vunpack.c.l.s4 1966171168
  %v1372 = vunpack.c.0.s8 %v1371
  %v1373 = vlaneseq
  %v1374 = vshrl.u32 %v1373, 7
  %v1375 = vsub.s32 %v1372, %v1374
  %v1376 = vrot.slane %v1360, %v1375
  %v1378 = vunpack.c.l.s4 1966171168
  %v1379 = vunpack.c.0.s8 %v1378
  %v1380 = vlaneseq
  %v1381 = vshrl.u32 %v1380, 7
  %v1382 = vsub.s32 %v1379, %v1381
  %v1383 = vrot.slane %v1367, %v1382
  %v1385 = vunpack.c.l.s4 1966171168
  %v1386 = vunpack.c.0.s8 %v1385
  %v1387 = vlaneseq
  %v1388 = vshrl.u32 %v1387, 7
  %v1389 = vsub.s32 %v1386, %v1388
  %v1390 = vrot.slane %v1368, %v1389
  %v1392 = vunpack.c.l.s4 1966171168
  %v1393 = vunpack.c.0.s8 %v1392
  %v1394 = vlaneseq
  %v1395 = vshrl.u32 %v1394, 7
  %v1396 = vsub.s32 %v1393, %v1395
  %v1397 = vrot.slane %v1369, %v1396
  %v1398 = vcombine.high %v1376, %v1376
  %v1399 = vcombine.high %v1383, %v1383
  %v1400 = vcombine.high %v1390, %v1390
  %v1401 = vcombine.high %v1397, %v1397
  %v1411 = vcombine.high %v591, %v591
  %v1413 = vunpack.c.l.s4 1966171168
  %v1414 = vunpack.c.0.s8 %v1413
  %v1415 = vlaneseq
  %v1416 = vshrl.u32 %v1415, 7
  %v1417 = vsub.s32 %v1414, %v1416
  %v1418 = vrot.slane %v591, %v1417
  %v1420 = vunpack.c.l.s4 1966171168
  %v1421 = vunpack.c.0.s8 %v1420
  %v1422 = vlaneseq
  %v1423 = vshrl.u32 %v1422, 7
  %v1424 = vsub.s32 %v1421, %v1423
  %v1425 = vrot.slane %v1411, %v1424
  %v1426 = vcombine.high %v1418, %v1418
  %v1427 = vcombine.high %v1425, %v1425
  %v1429 = vunpack.c.l.s4 1966171168
  %v1430 = vunpack.c.0.s8 %v1429
  %v1431 = vlaneseq
  %v1432 = vshrl.u32 %v1431, 7
  %v1433 = vsub.s32 %v1430, %v1432
  %v1434 = vrot.slane %v1418, %v1433
  %v1436 = vunpack.c.l.s4 1966171168
  %v1437 = vunpack.c.0.s8 %v1436
  %v1438 = vlaneseq
  %v1439 = vshrl.u32 %v1438, 7
  %v1440 = vsub.s32 %v1437, %v1439
  %v1441 = vrot.slane %v1425, %v1440
  %v1443 = vunpack.c.l.s4 1966171168
  %v1444 = vunpack.c.0.s8 %v1443
  %v1445 = vlaneseq
  %v1446 = vshrl.u32 %v1445, 7
  %v1447 = vsub.s32 %v1444, %v1446
  %v1448 = vrot.slane %v1426, %v1447
  %v1450 = vunpack.c.l.s4 1966171168
  %v1451 = vunpack.c.0.s8 %v1450
  %v1452 = vlaneseq
  %v1453 = vshrl.u32 %v1452, 7
  %v1454 = vsub.s32 %v1451, %v1453
  %v1455 = vrot.slane %v1427, %v1454
  %v1456 = vcombine.high %v1434, %v1434
  %v1457 = vcombine.high %v1441, %v1441
  %v1458 = vcombine.high %v1448, %v1448
  %v1459 = vcombine.high %v1455, %v1455
  %v1461 = vcombine.high %v717, %v717
  %v1463 = vunpack.c.l.s4 1966171168
  %v1464 = vunpack.c.0.s8 %v1463
  %v1465 = vlaneseq
  %v1466 = vshrl.u32 %v1465, 7
  %v1467 = vsub.s32 %v1464, %v1466
  %v1468 = vrot.slane %v717, %v1467
  %v1470 = vunpack.c.l.s4 1966171168
  %v1471 = vunpack.c.0.s8 %v1470
  %v1472 = vlaneseq
  %v1473 = vshrl.u32 %v1472, 7
  %v1474 = vsub.s32 %v1471, %v1473
  %v1475 = vrot.slane %v1461, %v1474
  %v1476 = vcombine.high %v1468, %v1468
  %v1477 = vcombine.high %v1475, %v1475
  %v1479 = vunpack.c.l.s4 1966171168
  %v1480 = vunpack.c.0.s8 %v1479
  %v1481 = vlaneseq
  %v1482 = vshrl.u32 %v1481, 7
  %v1483 = vsub.s32 %v1480, %v1482
  %v1484 = vrot.slane %v1468, %v1483
  %v1486 = vunpack.c.l.s4 1966171168
  %v1487 = vunpack.c.0.s8 %v1486
  %v1488 = vlaneseq
  %v1489 = vshrl.u32 %v1488, 7
  %v1490 = vsub.s32 %v1487, %v1489
  %v1491 = vrot.slane %v1475, %v1490
  %v1493 = vunpack.c.l.s4 1966171168
  %v1494 = vunpack.c.0.s8 %v1493
  %v1495 = vlaneseq
  %v1496 = vshrl.u32 %v1495, 7
  %v1497 = vsub.s32 %v1494, %v1496
  %v1498 = vrot.slane %v1476, %v1497
  %v1500 = vunpack.c.l.s4 1966171168
  %v1501 = vunpack.c.0.s8 %v1500
  %v1502 = vlaneseq
  %v1503 = vshrl.u32 %v1502, 7
  %v1504 = vsub.s32 %v1501, %v1503
  %v1505 = vrot.slane %v1477, %v1504
  %v1506 = vcombine.high %v1484, %v1484
  %v1507 = vcombine.high %v1491, %v1491
  %v1508 = vcombine.high %v1498, %v1498
  %v1509 = vcombine.high %v1505, %v1505
  %v1511 = vcombine.high %v843, %v843
  %v1513 = vunpack.c.l.s4 1966171168
  %v1514 = vunpack.c.0.s8 %v1513
  %v1515 = vlaneseq
  %v1516 = vshrl.u32 %v1515, 7
  %v1517 = vsub.s32 %v1514, %v1516
  %v1518 = vrot.slane %v843, %v1517
  %v1520 = vunpack.c.l.s4 1966171168
  %v1521 = vunpack.c.0.s8 %v1520
  %v1522 = vlaneseq
  %v1523 = vshrl.u32 %v1522, 7
  %v1524 = vsub.s32 %v1521, %v1523
  %v1525 = vrot.slane %v1511, %v1524
  %v1526 = vcombine.high %v1518, %v1518
  %v1527 = vcombine.high %v1525, %v1525
  %v1529 = vunpack.c.l.s4 1966171168
  %v1530 = vunpack.c.0.s8 %v1529
  %v1531 = vlaneseq
  %v1532 = vshrl.u32 %v1531, 7
  %v1533 = vsub.s32 %v1530, %v1532
  %v1534 = vrot.slane %v1518, %v1533
  %v1536 = vunpack.c.l.s4 1966171168
  %v1537 = vunpack.c.0.s8 %v1536
  %v1538 = vlaneseq
  %v1539 = vshrl.u32 %v1538, 7
  %v1540 = vsub.s32 %v1537, %v1539
  %v1541 = vrot.slane %v1525, %v1540
  %v1543 = vunpack.c.l.s4 1966171168
  %v1544 = vunpack.c.0.s8 %v1543
  %v1545 = vlaneseq
  %v1546 = vshrl.u32 %v1545, 7
  %v1547 = vsub.s32 %v1544, %v1546
  %v1548 = vrot.slane %v1526, %v1547
  %v1550 = vunpack.c.l.s4 1966171168
  %v1551 = vunpack.c.0.s8 %v1550
  %v1552 = vlaneseq
  %v1553 = vshrl.u32 %v1552, 7
  %v1554 = vsub.s32 %v1551, %v1553
  %v1555 = vrot.slane %v1527, %v1554
  %v1556 = vcombine.high %v1534, %v1534
  %v1557 = vcombine.high %v1541, %v1541
  %v1558 = vcombine.high %v1548, %v1548
  %v1559 = vcombine.high %v1555, %v1555
  %v1561 = vcombine.high %v969, %v969
  %v1563 = vunpack.c.l.s4 1966171168
  %v1564 = vunpack.c.0.s8 %v1563
  %v1565 = vlaneseq
  %v1566 = vshrl.u32 %v1565, 7
  %v1567 = vsub.s32 %v1564, %v1566
  %v1568 = vrot.slane %v969, %v1567
  %v1570 = vunpack.c.l.s4 1966171168
  %v1571 = vunpack.c.0.s8 %v1570
  %v1572 = vlaneseq
  %v1573 = vshrl.u32 %v1572, 7
  %v1574 = vsub.s32 %v1571, %v1573
  %v1575 = vrot.slane %v1561, %v1574
  %v1576 = vcombine.high %v1568, %v1568
  %v1577 = vcombine.high %v1575, %v1575
  %v1579 = vunpack.c.l.s4 1966171168
  %v1580 = vunpack.c.0.s8 %v1579
  %v1581 = vlaneseq
  %v1582 = vshrl.u32 %v1581, 7
  %v1583 = vsub.s32 %v1580, %v1582
  %v1584 = vrot.slane %v1568, %v1583
  %v1586 = vunpack.c.l.s4 1966171168
  %v1587 = vunpack.c.0.s8 %v1586
  %v1588 = vlaneseq
  %v1589 = vshrl.u32 %v1588, 7
  %v1590 = vsub.s32 %v1587, %v1589
  %v1591 = vrot.slane %v1575, %v1590
  %v1593 = vunpack.c.l.s4 1966171168
  %v1594 = vunpack.c.0.s8 %v1593
  %v1595 = vlaneseq
  %v1596 = vshrl.u32 %v1595, 7
  %v1597 = vsub.s32 %v1594, %v1596
  %v1598 = vrot.slane %v1576, %v1597
  %v1600 = vunpack.c.l.s4 1966171168
  %v1601 = vunpack.c.0.s8 %v1600
  %v1602 = vlaneseq
  %v1603 = vshrl.u32 %v1602, 7
  %v1604 = vsub.s32 %v1601, %v1603
  %v1605 = vrot.slane %v1577, %v1604
  %v1606 = vcombine.high %v1584, %v1584
  %v1607 = vcombine.high %v1591, %v1591
  %v1608 = vcombine.high %v1598, %v1598
  %v1609 = vcombine.high %v1605, %v1605
  %v1611 = vcombine.high %v1095, %v1095
  %v1613 = vunpack.c.l.s4 1966171168
  %v1614 = vunpack.c.0.s8 %v1613
  %v1615 = vlaneseq
  %v1616 = vshrl.u32 %v1615, 7
  %v1617 = vsub.s32 %v1614, %v1616
  %v1618 = vrot.slane %v1095, %v1617
  %v1620 = vunpack.c.l.s4 1966171168
  %v1621 = vunpack.c.0.s8 %v1620
  %v1622 = vlaneseq
  %v1623 = vshrl.u32 %v1622, 7
  %v1624 = vsub.s32 %v1621, %v1623
  %v1625 = vrot.slane %v1611, %v1624
  %v1626 = vcombine.high %v1618, %v1618
  %v1627 = vcombine.high %v1625, %v1625
  %v1629 = vunpack.c.l.s4 1966171168
  %v1630 = vunpack.c.0.s8 %v1629
  %v1631 = vlaneseq
  %v1632 = vshrl.u32 %v1631, 7
  %v1633 = vsub.s32 %v1630, %v1632
  %v1634 = vrot.slane %v1618, %v1633
  %v1636 = vunpack.c.l.s4 1966171168
  %v1637 = vunpack.c.0.s8 %v1636
  %v1638 = vlaneseq
  %v1639 = vshrl.u32 %v1638, 7
  %v1640 = vsub.s32 %v1637, %v1639
  %v1641 = vrot.slane %v1625, %v1640
  %v1643 = vunpack.c.l.s4 1966171168
  %v1644 = vunpack.c.0.s8 %v1643
  %v1645 = vlaneseq
  %v1646 = vshrl.u32 %v1645, 7
  %v1647 = vsub.s32 %v1644, %v1646
  %v1648 = vrot.slane %v1626, %v1647
  %v1650 = vunpack.c.l.s4 1966171168
  %v1651 = vunpack.c.0.s8 %v1650
  %v1652 = vlaneseq
  %v1653 = vshrl.u32 %v1652, 7
  %v1654 = vsub.s32 %v1651, %v1653
  %v1655 = vrot.slane %v1627, %v1654
  %v1656 = vcombine.high %v1634, %v1634
  %v1657 = vcombine.high %v1641, %v1641
  %v1658 = vcombine.high %v1648, %v1648
  %v1659 = vcombine.high %v1655, %v1655
  %v1661 = vcombine.high %v1221, %v1221
  %v1663 = vunpack.c.l.s4 1966171168
  %v1664 = vunpack.c.0.s8 %v1663
  %v1665 = vlaneseq
  %v1666 = vshrl.u32 %v1665, 7
  %v1667 = vsub.s32 %v1664, %v1666
  %v1668 = vrot.slane %v1221, %v1667
  %v1670 = vunpack.c.l.s4 1966171168
  %v1671 = vunpack.c.0.s8 %v1670
  %v1672 = vlaneseq
  %v1673 = vshrl.u32 %v1672, 7
  %v1674 = vsub.s32 %v1671, %v1673
  %v1675 = vrot.slane %v1661, %v1674
  %v1676 = vcombine.high %v1668, %v1668
  %v1677 = vcombine.high %v1675, %v1675
  %v1679 = vunpack.c.l.s4 1966171168
  %v1680 = vunpack.c.0.s8 %v1679
  %v1681 = vlaneseq
  %v1682 = vshrl.u32 %v1681, 7
  %v1683 = vsub.s32 %v1680, %v1682
  %v1684 = vrot.slane %v1668, %v1683
  %v1686 = vunpack.c.l.s4 1966171168
  %v1687 = vunpack.c.0.s8 %v1686
  %v1688 = vlaneseq
  %v1689 = vshrl.u32 %v1688, 7
  %v1690 = vsub.s32 %v1687, %v1689
  %v1691 = vrot.slane %v1675, %v1690
  %v1693 = vunpack.c.l.s4 1966171168
  %v1694 = vunpack.c.0.s8 %v1693
  %v1695 = vlaneseq
  %v1696 = vshrl.u32 %v1695, 7
  %v1697 = vsub.s32 %v1694, %v1696
  %v1698 = vrot.slane %v1676, %v1697
  %v1700 = vunpack.c.l.s4 1966171168
  %v1701 = vunpack.c.0.s8 %v1700
  %v1702 = vlaneseq
  %v1703 = vshrl.u32 %v1702, 7
  %v1704 = vsub.s32 %v1701, %v1703
  %v1705 = vrot.slane %v1677, %v1704
  %v1706 = vcombine.high %v1684, %v1684
  %v1707 = vcombine.high %v1691, %v1691
  %v1708 = vcombine.high %v1698, %v1698
  %v1709 = vcombine.high %v1705, %v1705
  %v1711 = vcombine.high %v1347, %v1347
  %v1713 = vunpack.c.l.s4 1966171168
  %v1714 = vunpack.c.0.s8 %v1713
  %v1715 = vlaneseq
  %v1716 = vshrl.u32 %v1715, 7
  %v1717 = vsub.s32 %v1714, %v1716
  %v1718 = vrot.slane %v1347, %v1717
  %v1720 = vunpack.c.l.s4 1966171168
  %v1721 = vunpack.c.0.s8 %v1720
  %v1722 = vlaneseq
  %v1723 = vshrl.u32 %v1722, 7
  %v1724 = vsub.s32 %v1721, %v1723
  %v1725 = vrot.slane %v1711, %v1724
  %v1726 = vcombine.high %v1718, %v1718
  %v1727 = vcombine.high %v1725, %v1725
  %v1729 = vunpack.c.l.s4 1966171168
  %v1730 = vunpack.c.0.s8 %v1729
  %v1731 = vlaneseq
  %v1732 = vshrl.u32 %v1731, 7
  %v1733 = vsub.s32 %v1730, %v1732
  %v1734 = vrot.slane %v1718, %v1733
  %v1736 = vunpack.c.l.s4 1966171168
  %v1737 = vunpack.c.0.s8 %v1736
  %v1738 = vlaneseq
  %v1739 = vshrl.u32 %v1738, 7
  %v1740 = vsub.s32 %v1737, %v1739
  %v1741 = vrot.slane %v1725, %v1740
  %v1743 = vunpack.c.l.s4 1966171168
  %v1744 = vunpack.c.0.s8 %v1743
  %v1745 = vlaneseq
  %v1746 = vshrl.u32 %v1745, 7
  %v1747 = vsub.s32 %v1744, %v1746
  %v1748 = vrot.slane %v1726, %v1747
  %v1750 = vunpack.c.l.s4 1966171168
  %v1751 = vunpack.c.0.s8 %v1750
  %v1752 = vlaneseq
  %v1753 = vshrl.u32 %v1752, 7
  %v1754 = vsub.s32 %v1751, %v1753
  %v1755 = vrot.slane %v1727, %v1754
  %v1756 = vcombine.high %v1734, %v1734
  %v1757 = vcombine.high %v1741, %v1741
  %v1758 = vcombine.high %v1748, %v1748
  %v1759 = vcombine.high %v1755, %v1755
  %v1760 = vlaneseq
  %v1761 = vshrl.u32 %v1760, 7
  %v1762 = vsub.s32 0, %v1761
  %v1763 = vrot.slane %v1434, %v1762
  %v1764 = vlaneseq
  %v1765 = vshrl.u32 %v1764, 7
  %v1766 = vsub.s32 0, %v1765
  %v1767 = vrot.slane %v1448, %v1766
  %v1768 = vlaneseq
  %v1769 = vshrl.u32 %v1768, 7
  %v1770 = vsub.s32 0, %v1769
  %v1771 = vrot.slane %v1456, %v1770
  %v1772 = vlaneseq
  %v1773 = vshrl.u32 %v1772, 7
  %v1774 = vsub.s32 0, %v1773
  %v1775 = vrot.slane %v1458, %v1774
  %v1776 = vlaneseq
  %v1777 = vshrl.u32 %v1776, 7
  %v1778 = vsub.s32 0, %v1777
  %v1779 = vrot.slane %v1441, %v1778
  %v1780 = vlaneseq
  %v1781 = vshrl.u32 %v1780, 7
  %v1782 = vsub.s32 0, %v1781
  %v1783 = vrot.slane %v1455, %v1782
  %v1784 = vlaneseq
  %v1785 = vshrl.u32 %v1784, 7
  %v1786 = vsub.s32 0, %v1785
  %v1787 = vrot.slane %v1457, %v1786
  %v1788 = vlaneseq
  %v1789 = vshrl.u32 %v1788, 7
  %v1790 = vsub.s32 0, %v1789
  %v1791 = vrot.slane %v1459, %v1790
  %v1800 = vlaneseq
  %v1801 = vshrl.u32 %v1800, 7
  %v1802 = vsub.s32 0, %v1801
  %v1803 = vrot.slane %v1484, %v1802
  %v1804 = vlaneseq
  %v1805 = vshrl.u32 %v1804, 7
  %v1806 = vsub.s32 0, %v1805
  %v1807 = vrot.slane %v1498, %v1806
  %v1808 = vlaneseq
  %v1809 = vshrl.u32 %v1808, 7
  %v1810 = vsub.s32 0, %v1809
  %v1811 = vrot.slane %v1506, %v1810
  %v1812 = vlaneseq
  %v1813 = vshrl.u32 %v1812, 7
  %v1814 = vsub.s32 0, %v1813
  %v1815 = vrot.slane %v1508, %v1814
  %v1816 = vlaneseq
  %v1817 = vshrl.u32 %v1816, 7
  %v1818 = vsub.s32 0, %v1817
  %v1819 = vrot.slane %v1491, %v1818
  %v1820 = vlaneseq
  %v1821 = vshrl.u32 %v1820, 7
  %v1822 = vsub.s32 0, %v1821
  %v1823 = vrot.slane %v1505, %v1822
  %v1824 = vlaneseq
  %v1825 = vshrl.u32 %v1824, 7
  %v1826 = vsub.s32 0, %v1825
  %v1827 = vrot.slane %v1507, %v1826
  %v1828 = vlaneseq
  %v1829 = vshrl.u32 %v1828, 7
  %v1830 = vsub.s32 0, %v1829
  %v1831 = vrot.slane %v1509, %v1830
  %v1840 = vlaneseq
  %v1841 = vshrl.u32 %v1840, 7
  %v1842 = vsub.s32 0, %v1841
  %v1843 = vrot.slane %v1534, %v1842
  %v1844 = vlaneseq
  %v1845 = vshrl.u32 %v1844, 7
  %v1846 = vsub.s32 0, %v1845
  %v1847 = vrot.slane %v1548, %v1846
  %v1848 = vlaneseq
  %v1849 = vshrl.u32 %v1848, 7
  %v1850 = vsub.s32 0, %v1849
  %v1851 = vrot.slane %v1556, %v1850
  %v1852 = vlaneseq
  %v1853 = vshrl.u32 %v1852, 7
  %v1854 = vsub.s32 0, %v1853
  %v1855 = vrot.slane %v1558, %v1854
  %v1856 = vlaneseq
  %v1857 = vshrl.u32 %v1856, 7
  %v1858 = vsub.s32 0, %v1857
  %v1859 = vrot.slane %v1541, %v1858
  %v1860 = vlaneseq
  %v1861 = vshrl.u32 %v1860, 7
  %v1862 = vsub.s32 0, %v1861
  %v1863 = vrot.slane %v1555, %v1862
  %v1864 = vlaneseq
  %v1865 = vshrl.u32 %v1864, 7
  %v1866 = vsub.s32 0, %v1865
  %v1867 = vrot.slane %v1557, %v1866
  %v1868 = vlaneseq
  %v1869 = vshrl.u32 %v1868, 7
  %v1870 = vsub.s32 0, %v1869
  %v1871 = vrot.slane %v1559, %v1870
  %v1880 = vlaneseq
  %v1881 = vshrl.u32 %v1880, 7
  %v1882 = vsub.s32 0, %v1881
  %v1883 = vrot.slane %v1584, %v1882
  %v1884 = vlaneseq
  %v1885 = vshrl.u32 %v1884, 7
  %v1886 = vsub.s32 0, %v1885
  %v1887 = vrot.slane %v1598, %v1886
  %v1888 = vlaneseq
  %v1889 = vshrl.u32 %v1888, 7
  %v1890 = vsub.s32 0, %v1889
  %v1891 = vrot.slane %v1606, %v1890
  %v1892 = vlaneseq
  %v1893 = vshrl.u32 %v1892, 7
  %v1894 = vsub.s32 0, %v1893
  %v1895 = vrot.slane %v1608, %v1894
  %v1896 = vlaneseq
  %v1897 = vshrl.u32 %v1896, 7
  %v1898 = vsub.s32 0, %v1897
  %v1899 = vrot.slane %v1591, %v1898
  %v1900 = vlaneseq
  %v1901 = vshrl.u32 %v1900, 7
  %v1902 = vsub.s32 0, %v1901
  %v1903 = vrot.slane %v1605, %v1902
  %v1904 = vlaneseq
  %v1905 = vshrl.u32 %v1904, 7
  %v1906 = vsub.s32 0, %v1905
  %v1907 = vrot.slane %v1607, %v1906
  %v1908 = vlaneseq
  %v1909 = vshrl.u32 %v1908, 7
  %v1910 = vsub.s32 0, %v1909
  %v1911 = vrot.slane %v1609, %v1910
  %v1920 = vlaneseq
  %v1921 = vshrl.u32 %v1920, 7
  %v1922 = vsub.s32 0, %v1921
  %v1923 = vrot.slane %v1634, %v1922
  %v1924 = vlaneseq
  %v1925 = vshrl.u32 %v1924, 7
  %v1926 = vsub.s32 0, %v1925
  %v1927 = vrot.slane %v1648, %v1926
  %v1928 = vlaneseq
  %v1929 = vshrl.u32 %v1928, 7
  %v1930 = vsub.s32 0, %v1929
  %v1931 = vrot.slane %v1656, %v1930
  %v1932 = vlaneseq
  %v1933 = vshrl.u32 %v1932, 7
  %v1934 = vsub.s32 0, %v1933
  %v1935 = vrot.slane %v1658, %v1934
  %v1936 = vlaneseq
  %v1937 = vshrl.u32 %v1936, 7
  %v1938 = vsub.s32 0, %v1937
  %v1939 = vrot.slane %v1641, %v1938
  %v1940 = vlaneseq
  %v1941 = vshrl.u32 %v1940, 7
  %v1942 = vsub.s32 0, %v1941
  %v1943 = vrot.slane %v1655, %v1942
  %v1944 = vlaneseq
  %v1945 = vshrl.u32 %v1944, 7
  %v1946 = vsub.s32 0, %v1945
  %v1947 = vrot.slane %v1657, %v1946
  %v1948 = vlaneseq
  %v1949 = vshrl.u32 %v1948, 7
  %v1950 = vsub.s32 0, %v1949
  %v1951 = vrot.slane %v1659, %v1950
  %v1960 = vlaneseq
  %v1961 = vshrl.u32 %v1960, 7
  %v1962 = vsub.s32 0, %v1961
  %v1963 = vrot.slane %v1684, %v1962
  %v1964 = vlaneseq
  %v1965 = vshrl.u32 %v1964, 7
  %v1966 = vsub.s32 0, %v1965
  %v1967 = vrot.slane %v1698, %v1966
  %v1968 = vlaneseq
  %v1969 = vshrl.u32 %v1968, 7
  %v1970 = vsub.s32 0, %v1969
  %v1971 = vrot.slane %v1706, %v1970
  %v1972 = vlaneseq
  %v1973 = vshrl.u32 %v1972, 7
  %v1974 = vsub.s32 0, %v1973
  %v1975 = vrot.slane %v1708, %v1974
  %v1976 = vlaneseq
  %v1977 = vshrl.u32 %v1976, 7
  %v1978 = vsub.s32 0, %v1977
  %v1979 = vrot.slane %v1691, %v1978
  %v1980 = vlaneseq
  %v1981 = vshrl.u32 %v1980, 7
  %v1982 = vsub.s32 0, %v1981
  %v1983 = vrot.slane %v1705, %v1982
  %v1984 = vlaneseq
  %v1985 = vshrl.u32 %v1984, 7
  %v1986 = vsub.s32 0, %v1985
  %v1987 = vrot.slane %v1707, %v1986
  %v1988 = vlaneseq
  %v1989 = vshrl.u32 %v1988, 7
  %v1990 = vsub.s32 0, %v1989
  %v1991 = vrot.slane %v1709, %v1990
  %v2000 = vlaneseq
  %v2001 = vshrl.u32 %v2000, 7
  %v2002 = vsub.s32 0, %v2001
  %v2003 = vrot.slane %v1734, %v2002
  %v2004 = vlaneseq
  %v2005 = vshrl.u32 %v2004, 7
  %v2006 = vsub.s32 0, %v2005
  %v2007 = vrot.slane %v1748, %v2006
  %v2008 = vlaneseq
  %v2009 = vshrl.u32 %v2008, 7
  %v2010 = vsub.s32 0, %v2009
  %v2011 = vrot.slane %v1756, %v2010
  %v2012 = vlaneseq
  %v2013 = vshrl.u32 %v2012, 7
  %v2014 = vsub.s32 0, %v2013
  %v2015 = vrot.slane %v1758, %v2014
  %v2016 = vlaneseq
  %v2017 = vshrl.u32 %v2016, 7
  %v2018 = vsub.s32 0, %v2017
  %v2019 = vrot.slane %v1741, %v2018
  %v2020 = vlaneseq
  %v2021 = vshrl.u32 %v2020, 7
  %v2022 = vsub.s32 0, %v2021
  %v2023 = vrot.slane %v1755, %v2022
  %v2024 = vlaneseq
  %v2025 = vshrl.u32 %v2024, 7
  %v2026 = vsub.s32 0, %v2025
  %v2027 = vrot.slane %v1757, %v2026
  %v2028 = vlaneseq
  %v2029 = vshrl.u32 %v2028, 7
  %v2030 = vsub.s32 0, %v2029
  %v2031 = vrot.slane %v1759, %v2030
  %vm2040 = vcmask 1040384
  %v2041 = vsel %vm2040, %v1376, %v1763
  %v2042 = vsel %vm2040, %v1390, %v1767
  %v2043 = vsel %vm2040, %v1398, %v1771
  %v2044 = vsel %vm2040, %v1400, %v1775
  %v2045 = vsel %vm2040, %v1383, %v1779
  %v2046 = vsel %vm2040, %v1397, %v1783
  %v2047 = vsel %vm2040, %v1399, %v1787
  %v2048 = vsel %vm2040, %v1401, %v1791
  %vm2049 = vcmask 1041408
  %v2050 = vsel %vm2049, %v2041, %v1803
  %v2051 = vsel %vm2049, %v2042, %v1807
  %v2052 = vsel %vm2049, %v2043, %v1811
  %v2053 = vsel %vm2049, %v2044, %v1815
  %v2054 = vsel %vm2049, %v2045, %v1819
  %v2055 = vsel %vm2049, %v2046, %v1823
  %v2056 = vsel %vm2049, %v2047, %v1827
  %v2057 = vsel %vm2049, %v2048, %v1831
  %vm2058 = vcmask 1042432
  %v2059 = vsel %vm2058, %v2050, %v1843
  %v2060 = vsel %vm2058, %v2051, %v1847
  %v2061 = vsel %vm2058, %v2052, %v1851
  %v2062 = vsel %vm2058, %v2053, %v1855
  %v2063 = vsel %vm2058, %v2054, %v1859
  %v2064 = vsel %vm2058, %v2055, %v1863
  %v2065 = vsel %vm2058, %v2056, %v1867
  %v2066 = vsel %vm2058, %v2057, %v1871
  %vm2067 = vcmask 1043456
  %v2068 = vsel %vm2067, %v2059, %v1883
  %v2069 = vsel %vm2067, %v2060, %v1887
  %v2070 = vsel %vm2067, %v2061, %v1891
  %v2071 = vsel %vm2067, %v2062, %v1895
  %v2072 = vsel %vm2067, %v2063, %v1899
  %v2073 = vsel %vm2067, %v2064, %v1903
  %v2074 = vsel %vm2067, %v2065, %v1907
  %v2075 = vsel %vm2067, %v2066, %v1911
  %vm2076 = vcmask 1044480
  %v2077 = vsel %vm2076, %v2068, %v1923
  %v2078 = vsel %vm2076, %v2069, %v1927
  %v2079 = vsel %vm2076, %v2070, %v1931
  %v2080 = vsel %vm2076, %v2071, %v1935
  %v2081 = vsel %vm2076, %v2072, %v1939
  %v2082 = vsel %vm2076, %v2073, %v1943
  %v2083 = vsel %vm2076, %v2074, %v1947
  %v2084 = vsel %vm2076, %v2075, %v1951
  %vm2085 = vcmask 1045504
  %v2086 = vsel %vm2085, %v2077, %v1963
  %v2087 = vsel %vm2085, %v2078, %v1967
  %v2088 = vsel %vm2085, %v2079, %v1971
  %v2089 = vsel %vm2085, %v2080, %v1975
  %v2090 = vsel %vm2085, %v2081, %v1979
  %v2091 = vsel %vm2085, %v2082, %v1983
  %v2092 = vsel %vm2085, %v2083, %v1987
  %v2093 = vsel %vm2085, %v2084, %v1991
  %vm2094 = vcmask 1046528
  %v2095 = vsel %vm2094, %v2086, %v2003
  %v2096 = vsel %vm2094, %v2087, %v2007
  %v2097 = vsel %vm2094, %v2088, %v2011
  %v2098 = vsel %vm2094, %v2089, %v2015
  %v2099 = vsel %vm2094, %v2090, %v2019
  %v2100 = vsel %vm2094, %v2091, %v2023
  %v2101 = vsel %vm2094, %v2092, %v2027
  %v2102 = vsel %vm2094, %v2093, %v2031
  %v2103 = vpack.c.bf16 %v2095, %v2095
  %v2104 = vpack.c.bf16 %v2096, %v2096
  %v2105 = vpack.c.bf16 %v2097, %v2097
  %v2106 = vpack.c.bf16 %v2098, %v2098
  %v2107 = vpack.c.bf16 %v2099, %v2099
  %v2108 = vpack.c.bf16 %v2100, %v2100
  %v2109 = vpack.c.bf16 %v2101, %v2101
  %v2110 = vpack.c.bf16 %v2102, %v2102
  %2111 = vst [vmem:[%s3] sm:$0xf] %v2103
  %2112 = vst [vmem:[%s3 + $0x4] sm:$0xf] %v2104
  %2113 = vst [vmem:[%s3 + $0x8] sm:$0xf] %v2105
  %2114 = vst [vmem:[%s3 + $0xc] sm:$0xf] %v2106
  %2115 = vst [vmem:[%s3 + $0x10] sm:$0xf] %v2107
  %2116 = vst [vmem:[%s3 + $0x14] sm:$0xf] %v2108
  %2117 = vst [vmem:[%s3 + $0x18] sm:$0xf] %v2109
  %2118 = vst [vmem:[%s3 + $0x1c] sm:$0xf] %v2110
  // Predicated region
  $region48: #{encoder_forward.1} parent=0 // pred_check
    %p2119 = pneg %p16
  $region49: #{encoder_forward.1} parent=0 // pred_check_branch
    %2121 = sbr.rel (%p2119) target = $region51
  $region50: #{encoder_forward.1} parent=0 // pred_region
    %2122 = vst [vmem:[%s4] sm:$0xff] %v1348
    %2123 = vst [vmem:[%s5] sm:$0xff] %v1349
  $region51: #{encoder_forward.1} parent=0 // pred_fallthru
    _
  // Predicated region
  $region52: #{encoder_forward.1} parent=0 // pred_check
    _
  $region53: #{encoder_forward.1} parent=0 // pred_check_branch
    %2125 = sbr.rel (0) target = $region55
  $region54: #{encoder_forward.1} parent=0 // pred_region
    _
  $region55: #{encoder_forward.1} parent=0 // pred_fallthru
    _
  // Predicated region
  $region56: #{encoder_forward.1} parent=0 // pred_check
    _
  $region57: #{encoder_forward.1} parent=0 // pred_check_branch
    %2127 = sbr.rel (0) target = $region59
  $region58: #{encoder_forward.1} parent=0 // pred_region
    _
  $region59: #{encoder_forward.1} parent=0 // pred_fallthru
    _
  // Predicated region
  $region60: #{encoder_forward.1} parent=0 // pred_check
    _
  $region61: #{encoder_forward.1} parent=0 // pred_check_branch
    %2129 = sbr.rel (0) target = $region63
  $region62: #{encoder_forward.1} parent=0 // pred_region
    _
  $region63: #{encoder_forward.1} parent=0 // pred_fallthru
    _
  // Predicated region
  $region64: #{encoder_forward.1} parent=0 // pred_check
    _
  $region65: #{encoder_forward.1} parent=0 // pred_check_branch
    %2131 = sbr.rel (0) target = $region67
  $region66: #{encoder_forward.1} parent=0 // pred_region
    _
  $region67: #{encoder_forward.1} parent=0 // pred_fallthru
    _
  // Predicated region
  $region68: #{encoder_forward.1} parent=0 // pred_check
    _
  $region69: #{encoder_forward.1} parent=0 // pred_check_branch
    %2133 = sbr.rel (0) target = $region71
  $region70: #{encoder_forward.1} parent=0 // pred_region
    _
  $region71: #{encoder_forward.1} parent=0 // pred_fallthru
    _
  // Predicated region
  $region72: #{encoder_forward.1} parent=0 // pred_check
    _
  $region73: #{encoder_forward.1} parent=0 // pred_check_branch
    %2135 = sbr.rel (0) target = $region75
  $region74: #{encoder_forward.1} parent=0 // pred_region
    _
  $region75: #{encoder_forward.1} parent=0 // pred_fallthru
    _
  %2136 = vsyncmov [#allocation5]
  %s2137 = vpop.sfrf %2136
  %p2138 = scmp.eq.s32.totalorder %s2137, 0
  %p2139 = pneg %p2138
  %2141 = shalt.err (%p2139)

</llo_original>
